<compile_context>
chip_gen: v7x
topology: tpu7x:2x2x1
jax: 0.10.0
libtpu: 0.0.40
codegen_flags: <defaults>
</compile_context>

<pallas_src>
import jax
import jax.numpy as jnp
from jax import lax
from jax.experimental import pallas as pl
from jax.experimental.pallas import tpu as pltpu


_W3_ROWS = 8  # pad the (1, 256) final-layer row to 8 sublanes (MXU-friendly M)


def _leaky_relu(x, slope=0.2):
    return jnp.where(x > 0, x, slope * x)


def discriminator_kernel(x_ref, w1_ref, b1_ref, w2_ref, b2_ref, w3_ref, b3_ref,
                         o_ref):
    # Layer 1: Linear(D, 512) + LeakyReLU(0.2).
    # x arrives f32 (no separate HBM cast pass); cast the tile to bf16 for the MXU.
    x_bf = x_ref[...].astype(jnp.bfloat16)
    h1 = jnp.dot(x_bf, w1_ref[...], preferred_element_type=jnp.float32)
    h1 = _leaky_relu(h1 + b1_ref[...])                        # (TB, 512) f32

    # Layer 2: Linear(512, 256) + LeakyReLU(0.2); bf16 MXU operands, f32 acc.
    h2 = jnp.dot(h1.astype(jnp.bfloat16), w2_ref[...],
                 preferred_element_type=jnp.float32)
    h2 = _leaky_relu(h2 + b2_ref[...])                        # (TB, 256) f32

    # Layer 3: Linear(256, 1) + Sigmoid.
    # Contract w3 (8, 256; only row 0 is real) against h2's feature axis so the
    # useful result is a lane-dense (1, TB) row — no padded output columns, no
    # masked stores, 4 B of writeback per batch row.
    logits8 = lax.dot_general(
        w3_ref[...], h2.astype(jnp.bfloat16),
        dimension_numbers=(((1,), (1,)), ((), ())),
        preferred_element_type=jnp.float32)                   # (8, TB) f32
    o_ref[0] = jax.nn.sigmoid(logits8[0:1, :] + b3_ref[...])  # (1, TB) f32


def _pick_tile_and_limit(B, D, H1, H2, tb_max):
    """Choose the batch tile TB and the VMEM limit."""
    try:
        vmem_cap = int(pltpu.get_tpu_info().vmem_capacity_bytes)
    except Exception:
        vmem_cap = 64 * 1024 * 1024        # safe everywhere (v7x physical = 64 MiB)
    budget = (vmem_cap * 3) // 4           # ~96 MiB v5e/v6e, ~48 MiB v7x

    # Resident weights/biases (conservatively x2 for the pipeline's buffers).
    fixed = 2 * (D * H1 * 2 + H1 * 4 + H1 * H2 * 2 + H2 * 4 + _W3_ROWS * H2 * 2 + 4)
    # Per-batch-row VMEM: f32 x tile (double-buffered) + in-kernel bf16 copy of x
    # + f32/bf16 intermediates (h1, h2) + output row (negligible).
    per_row = D * 4 * 2 + D * 2 + (H1 + H2) * 6 + 16
    avail = max(budget - fixed, per_row * 8)
    tb_fit = max(((avail // per_row) // 8) * 8, 8)

    # Keep at least 2 grid steps when the batch allows (v7x has 2 TensorCores and
    # shards "parallel" grid axes across them).
    tb_two = max((((B + 1) // 2 + 7) // 8) * 8, 8)

    tb = max(min(tb_max, tb_fit, tb_two), 8)
    return tb, int(budget)


def discriminator_forward(x_nchw, params, *, tb=1024):
    """Forward pass equivalent to the PyTorch Discriminator.

    x_nchw: [B, C, H, W] float32
    params: dict with w1[D,512], b1[512], w2[512,256], b2[256], w3[256,1], b3[1]
    returns: [B, 1] float32 (sigmoid probabilities)
    """
    B = x_nchw.shape[0]
    D, H1 = params["w1"].shape
    H2 = params["w2"].shape[1]

    # x.view(-1, imgDim): contiguous reshape (free); stays f32 — cast happens
    # inside the kernel to avoid an extra HBM pass over the dominant tensor.
    x2d = x_nchw.reshape(B, D)

    w1 = params["w1"].astype(jnp.bfloat16)
    w2 = params["w2"].astype(jnp.bfloat16)
    b1 = params["b1"].reshape(1, H1).astype(jnp.float32)
    b2 = params["b2"].reshape(1, H2).astype(jnp.float32)
    b3 = params["b3"].reshape(1, 1).astype(jnp.float32)
    # Final layer as an (8, 256) row block (row 0 = w3^T, rest zero) -> MXU-friendly M.
    w3 = jnp.zeros((_W3_ROWS, H2), jnp.float32).at[0].set(
        params["w3"].reshape(H2)).astype(jnp.bfloat16)

    TB, vmem_limit = _pick_tile_and_limit(B, D, H1, H2, tb)
    Bp = pl.cdiv(B, TB) * TB
    if Bp != B:
        x2d = jnp.pad(x2d, ((0, Bp - B), (0, 0)))
    num_tiles = Bp // TB

    out = pl.pallas_call(
        discriminator_kernel,
        out_shape=jax.ShapeDtypeStruct((num_tiles, 1, TB), jnp.float32),
        grid=(num_tiles,),
        in_specs=[
            pl.BlockSpec((TB, D), lambda i: (i, 0)),        # x: batch-tiled, f32
            pl.BlockSpec((D, H1), lambda i: (0, 0)),        # w1 bf16 (VMEM-resident)
            pl.BlockSpec((1, H1), lambda i: (0, 0)),        # b1 f32
            pl.BlockSpec((H1, H2), lambda i: (0, 0)),       # w2 bf16
            pl.BlockSpec((1, H2), lambda i: (0, 0)),        # b2 f32
            pl.BlockSpec((_W3_ROWS, H2), lambda i: (0, 0)), # w3 rows bf16
            pl.BlockSpec((1, 1), lambda i: (0, 0)),         # b3 f32
        ],
        out_specs=pl.BlockSpec((1, 1, TB), lambda i: (i, 0, 0)),
        compiler_params=pltpu.CompilerParams(
            dimension_semantics=("parallel",),
            vmem_limit_bytes=vmem_limit,
        ),
    )(x2d, w1, b1, w2, b2, w3, b3)

    # (num_tiles, 1, TB) -> (Bp,) -> strip batch padding -> (B, 1)
    return out.reshape(Bp)[:B].reshape(B, 1)


def init_params(key, img_dim):
    """Deterministic init, mimicking PyTorch's default U(-1/sqrt(fan_in), +)."""
    def linear(k, fan_in, fan_out):
        kw, kb = jax.random.split(k)
        bound = 1.0 / jnp.sqrt(jnp.float32(fan_in))
        # Stored as [in, out] so the kernel does x @ w.
        w = jax.random.uniform(kw, (fan_in, fan_out), jnp.float32,
                               minval=-bound, maxval=bound)
        b = jax.random.uniform(kb, (fan_out,), jnp.float32,
                               minval=-bound, maxval=bound)
        return w, b

    k1, k2, k3 = jax.random.split(key, 3)
    w1, b1 = linear(k1, img_dim, 512)
    w2, b2 = linear(k2, 512, 256)
    w3, b3 = linear(k3, 256, 1)
    return {"w1": w1, "b1": b1, "w2": w2, "b2": b2, "w3": w3, "b3": b3}


def reference_forward(x_nchw, params):
    """Plain-JAX reference mirroring the kernel's precision scheme
    (bf16 MXU operands on all layers, f32 accumulation, f32 epilogue)."""
    B = x_nchw.shape[0]
    x = x_nchw.reshape(B, -1)
    q = lambda a: a.astype(jnp.bfloat16).astype(jnp.float32)
    h = q(x) @ q(params["w1"]) + params["b1"]
    h = jnp.where(h > 0, h, 0.2 * h)
    h = q(h) @ q(params["w2"]) + params["b2"]
    h = jnp.where(h > 0, h, 0.2 * h)
    h = q(h) @ q(params["w3"]) + params["b3"]
    return jax.nn.sigmoid(h)


if __name__ == "__main__":
    # Small shapes consistent with the module: flattened image of 16x16x3.
    B, C, H, W = 2, 3, 16, 16
    img_dim = C * H * W  # 768 (module default would be 64*64*3; scaled down)

    key = jax.random.PRNGKey(0)
    k_params, k_x = jax.random.split(key)
    params = init_params(k_params, img_dim)

    # Test 1: tiny batch (single grid step).
    x = jax.random.normal(k_x, (B, C, H, W), dtype=jnp.float32)
    out = jax.block_until_ready(discriminator_forward(x, params))
    ref = reference_forward(x, params)
    assert out.shape == (B, 1)
    assert jnp.allclose(out, ref, atol=2e-3), (out, ref)

    # Test 2: multi-tile path (2 grid steps + batch padding).
    B2 = 300
    x2 = jax.random.normal(jax.random.PRNGKey(1), (B2, C, H, W), dtype=jnp.float32)
    out2 = jax.block_until_ready(discriminator_forward(x2, params))
    ref2 = reference_forward(x2, params)
    assert out2.shape == (B2, 1)
    assert jnp.allclose(out2, ref2, atol=2e-3)

    print("KERNEL_OK")
</pallas_src>

<mosaic_0001>
module attributes {stable_mosaic.version = 11 : i64} {
  func.func @discriminator_kernel(%arg0: i32, %arg1: memref<8x768xf32, #tpu.memory_space<vmem>>, %arg2: memref<768x512xbf16, #tpu.memory_space<vmem>>, %arg3: memref<1x512xf32, #tpu.memory_space<vmem>>, %arg4: memref<512x256xbf16, #tpu.memory_space<vmem>>, %arg5: memref<1x256xf32, #tpu.memory_space<vmem>>, %arg6: memref<8x256xbf16, #tpu.memory_space<vmem>>, %arg7: memref<1x1xf32, #tpu.memory_space<vmem>>, %arg8: memref<1x1x8xf32, #tpu.memory_space<vmem>>) attributes {dimension_semantics = [#tpu.dimension_semantics<parallel>], iteration_bounds = array<i64: 1>, scalar_prefetch = 0 : i64, scratch_operands = 0 : i64, tpu.core_type = #tpu.core_type<tc>, window_params = [{transform_indices = @transform_0, window_bounds = array<i64: 8, 768>}, {pipeline_mode = #tpu.pipeline_mode<synchronous>, transform_indices = @transform_1, window_bounds = array<i64: 768, 512>}, {pipeline_mode = #tpu.pipeline_mode<synchronous>, transform_indices = @transform_2, window_bounds = array<i64: 1, 512>}, {pipeline_mode = #tpu.pipeline_mode<synchronous>, transform_indices = @transform_3, window_bounds = array<i64: 512, 256>}, {pipeline_mode = #tpu.pipeline_mode<synchronous>, transform_indices = @transform_4, window_bounds = array<i64: 1, 256>}, {pipeline_mode = #tpu.pipeline_mode<synchronous>, transform_indices = @transform_5, window_bounds = array<i64: 8, 256>}, {pipeline_mode = #tpu.pipeline_mode<synchronous>, transform_indices = @transform_6, window_bounds = array<i64: 1, 1>}, {transform_indices = @transform_7, window_bounds = array<i64: 1, 1, 8>}]} {
    %c0 = arith.constant 0 : index
    %c0_0 = arith.constant 0 : index
    %0 = vector.load %arg1[%c0, %c0_0] : memref<8x768xf32, #tpu.memory_space<vmem>>, vector<8x768xf32>
    %1 = arith.truncf %0 : vector<8x768xf32> to vector<8x768xbf16>
    %c0_1 = arith.constant 0 : index
    %c0_2 = arith.constant 0 : index
    %2 = vector.load %arg2[%c0_1, %c0_2] : memref<768x512xbf16, #tpu.memory_space<vmem>>, vector<768x512xbf16>
    %cst = arith.constant dense<0.000000e+00> : vector<8x512xf32>
    %3 = tpu.matmul %1, %2, %cst {dimension_numbers = #tpu.dot_dimension_numbers<[1], [0], [0], [1], [0, 0, 1, 1], [], []>} : vector<8x768xbf16>, vector<768x512xbf16>, vector<8x512xf32> -> vector<8x512xf32>
    %c0_3 = arith.constant 0 : index
    %c0_4 = arith.constant 0 : index
    %4 = vector.load %arg3[%c0_3, %c0_4] : memref<1x512xf32, #tpu.memory_space<vmem>>, vector<1x512xf32>
    %5 = vector.broadcast %4 : vector<1x512xf32> to vector<8x512xf32>
    %6 = arith.addf %3, %5 : vector<8x512xf32>
    %cst_5 = arith.constant 0.000000e+00 : f32
    %7 = vector.broadcast %cst_5 : f32 to vector<8x512xf32>
    %8 = arith.cmpf ogt, %6, %7 : vector<8x512xf32>
    %cst_6 = arith.constant 2.000000e-01 : f32
    %9 = vector.broadcast %cst_6 : f32 to vector<8x512xf32>
    %10 = arith.mulf %9, %6 : vector<8x512xf32>
    %11 = arith.select %8, %6, %10 : vector<8x512xi1>, vector<8x512xf32>
    %12 = arith.truncf %11 : vector<8x512xf32> to vector<8x512xbf16>
    %c0_7 = arith.constant 0 : index
    %c0_8 = arith.constant 0 : index
    %13 = vector.load %arg4[%c0_7, %c0_8] : memref<512x256xbf16, #tpu.memory_space<vmem>>, vector<512x256xbf16>
    %cst_9 = arith.constant dense<0.000000e+00> : vector<8x256xf32>
    %14 = tpu.matmul %12, %13, %cst_9 {dimension_numbers = #tpu.dot_dimension_numbers<[1], [0], [0], [1], [0, 0, 1, 1], [], []>} : vector<8x512xbf16>, vector<512x256xbf16>, vector<8x256xf32> -> vector<8x256xf32>
    %c0_10 = arith.constant 0 : index
    %c0_11 = arith.constant 0 : index
    %15 = vector.load %arg5[%c0_10, %c0_11] : memref<1x256xf32, #tpu.memory_space<vmem>>, vector<1x256xf32>
    %16 = vector.broadcast %15 : vector<1x256xf32> to vector<8x256xf32>
    %17 = arith.addf %14, %16 : vector<8x256xf32>
    %cst_12 = arith.constant 0.000000e+00 : f32
    %18 = vector.broadcast %cst_12 : f32 to vector<8x256xf32>
    %19 = arith.cmpf ogt, %17, %18 : vector<8x256xf32>
    %cst_13 = arith.constant 2.000000e-01 : f32
    %20 = vector.broadcast %cst_13 : f32 to vector<8x256xf32>
    %21 = arith.mulf %20, %17 : vector<8x256xf32>
    %22 = arith.select %19, %17, %21 : vector<8x256xi1>, vector<8x256xf32>
    %c0_14 = arith.constant 0 : index
    %c0_15 = arith.constant 0 : index
    %23 = vector.load %arg6[%c0_14, %c0_15] : memref<8x256xbf16, #tpu.memory_space<vmem>>, vector<8x256xbf16>
    %24 = arith.truncf %22 : vector<8x256xf32> to vector<8x256xbf16>
    %cst_16 = arith.constant dense<0.000000e+00> : vector<8x8xf32>
    %25 = tpu.matmul %23, %24, %cst_16 {dimension_numbers = #tpu.dot_dimension_numbers<[1], [1], [0], [0], [0, 0, 1, 0], [], []>} : vector<8x256xbf16>, vector<8x256xbf16>, vector<8x8xf32> -> vector<8x8xf32>
    %26 = vector.extract_strided_slice %25 {offsets = [0, 0], sizes = [1, 8], strides = [1, 1]} : vector<8x8xf32> to vector<1x8xf32>
    %c0_17 = arith.constant 0 : index
    %c0_18 = arith.constant 0 : index
    %27 = vector.load %arg7[%c0_17, %c0_18] : memref<1x1xf32, #tpu.memory_space<vmem>>, vector<1x1xf32>
    %28 = vector.broadcast %27 : vector<1x1xf32> to vector<1x8xf32>
    %29 = arith.addf %26, %28 : vector<1x8xf32>
    %30 = arith.negf %29 : vector<1x8xf32>
    %31 = math.exp %30 : vector<1x8xf32>
    %cst_19 = arith.constant 1.000000e+00 : f32
    %32 = vector.broadcast %cst_19 : f32 to vector<1x8xf32>
    %33 = arith.addf %32, %31 : vector<1x8xf32>
    %34 = arith.divf %32, %33 : vector<1x8xf32>
    %c0_20 = arith.constant 0 : index
    %c0_21 = arith.constant 0 : index
    %c0_22 = arith.constant 0 : index
    %35 = vector.load %arg8[%c0_20, %c0_21, %c0_22] : memref<1x1x8xf32, #tpu.memory_space<vmem>>, vector<1x1x8xf32>
    %36 = vector.shape_cast %35 : vector<1x1x8xf32> to vector<1x8xf32>
    %37 = vector.shape_cast %34 : vector<1x8xf32> to vector<1x1x8xf32>
    tpu.vector_store %arg8[%c0_20, %c0_21, %c0_22], %37 {strides = array<i32>} : memref<1x1x8xf32, #tpu.memory_space<vmem>>, vector<1x1x8xf32>,
    return
  }
  func.func @transform_0(%arg0: i32) -> (i32, i32) {
    %c0_i32 = arith.constant 0 : i32
    %c0_i32_0 = arith.constant 0 : i32
    return %arg0, %c0_i32 : i32, i32
  }
  func.func @transform_1(%arg0: i32) -> (i32, i32) {
    %c0_i32 = arith.constant 0 : i32
    %c0_i32_0 = arith.constant 0 : i32
    %c0_i32_1 = arith.constant 0 : i32
    return %c0_i32, %c0_i32_0 : i32, i32
  }
  func.func @transform_2(%arg0: i32) -> (i32, i32) {
    %c0_i32 = arith.constant 0 : i32
    %c0_i32_0 = arith.constant 0 : i32
    %c0_i32_1 = arith.constant 0 : i32
    return %c0_i32, %c0_i32_0 : i32, i32
  }
  func.func @transform_3(%arg0: i32) -> (i32, i32) {
    %c0_i32 = arith.constant 0 : i32
    %c0_i32_0 = arith.constant 0 : i32
    %c0_i32_1 = arith.constant 0 : i32
    return %c0_i32, %c0_i32_0 : i32, i32
  }
  func.func @transform_4(%arg0: i32) -> (i32, i32) {
    %c0_i32 = arith.constant 0 : i32
    %c0_i32_0 = arith.constant 0 : i32
    %c0_i32_1 = arith.constant 0 : i32
    return %c0_i32, %c0_i32_0 : i32, i32
  }
  func.func @transform_5(%arg0: i32) -> (i32, i32) {
    %c0_i32 = arith.constant 0 : i32
    %c0_i32_0 = arith.constant 0 : i32
    %c0_i32_1 = arith.constant 0 : i32
    return %c0_i32, %c0_i32_0 : i32, i32
  }
  func.func @transform_6(%arg0: i32) -> (i32, i32) {
    %c0_i32 = arith.constant 0 : i32
    %c0_i32_0 = arith.constant 0 : i32
    %c0_i32_1 = arith.constant 0 : i32
    return %c0_i32, %c0_i32_0 : i32, i32
  }
  func.func @transform_7(%arg0: i32) -> (i32, i32, i32) {
    %c0_i32 = arith.constant 0 : i32
    %c0_i32_0 = arith.constant 0 : i32
    %c0_i32_1 = arith.constant 0 : i32
    return %arg0, %c0_i32, %c0_i32_0 : i32, i32, i32
  }
}

</mosaic_0001>

<llo_original>
// kernel: tpu_custom_call.1
$region0: #{tpu_custom_call.1}
  #allocation0 [shape = 'u32[]', space=smem, size = 0x4, offset = 0x4, fixed_abs, tag = 'smem constant byte address 0x4 - core index']
  #allocation1 [shape = 'u32[144,128]{1,0:T(1,128)}', space=vmem, size = 0x12000, scoped, tag = 'internal scratch']
  #allocation2 [shape = 'f32[1,1]{1,0:T(1,128)S(1)}', space=vmem, size = 0x200, scoped, tag = 'scoped memory for tpu_custom_call.1']
  %s0 = inlined_call_operand.hbm [shape: f32[8,768], index: 0, kind: input, shape index: {}]
  %s1 = inlined_call_operand.hbm [shape: bf16[768,512], index: 1, kind: input, shape index: {}]
  %s2 = inlined_call_operand.vmem [shape: f32[1,512], index: 2, kind: input, shape index: {}]
  %s3 = inlined_call_operand.hbm [shape: bf16[512,256], index: 3, kind: input, shape index: {}]
  %s4 = inlined_call_operand.vmem [shape: f32[1,256], index: 4, kind: input, shape index: {}]
  %s5 = inlined_call_operand.vmem [shape: bf16[8,256], index: 5, kind: input, shape index: {}]
  %s6 = inlined_call_operand.<no memory space> [shape: f32[1,1], index: 6, kind: input, shape index: {}]
  %s7 = inlined_call_operand.hbm [shape: f32[1,1,8], index: 7, kind: output, shape index: {}]
  %s8 = sld [smem:[#allocation0]]
  $region50: #{tpu_custom_call.1} parent=0
    _
  %s10 = ssub.s32 1, %s8
  %s11 = scalar_select 0, %s10, %s8
  %v12 = vstv %s6
  %13 = vst [vmem:[#allocation2] sm:$0x1] %v12
  $region1: #{tpu_custom_call.1} parent=0
    #allocation3 [shape = 'u8[24576]{0}', space=vmem, size = 0x6000, scoped, tag = 'input window, operand 0, single buffered']
    #allocation4 [shape = 's32[1]{0}', space=sflag, size = 0x4, scoped, tag = 'scoped memory for tpu_custom_call.1']
    #allocation5 [shape = 's32[1]{0}', space=sflag, size = 0x4, scoped, tag = 'scoped memory for tpu_custom_call.1']
    #allocation6 [shape = 'u8[786432]{0}', space=vmem, size = 0xc0000, scoped, tag = 'input window, operand 1, single buffered']
    #allocation7 [shape = 's32[1]{0}', space=sflag, size = 0x4, scoped, tag = 'scoped memory for tpu_custom_call.1']
    #allocation8 [shape = 'u8[262144]{0}', space=vmem, size = 0x40000, scoped, tag = 'input window, operand 3, single buffered']
    #allocation9 [shape = 'u8[512]{0}', space=vmem, size = 0x400, scoped, tag = 'output window, operand 0, single buffered']
    %14 = vsyncpa [#allocation4], 0
    %15 = vsyncpa [#allocation7], 0
    %16 = vsyncpa [#allocation5], 0
    // Predicated region
    $region2: #{tpu_custom_call.1} parent=1 // pred_check
      _
    $region3: #{tpu_custom_call.1} parent=1 // pred_check_branch
      %18 = sbr.rel (0) target = $region5
    $region4: #{tpu_custom_call.1} parent=1 // pred_region
      %s20 = ssub.s32 768, 768
      %21 = vsyncadd [#allocation4], %s20
      %s23 = sshll.u32 [#allocation3], 4
      %s24 = int_to_ptr.vmem [resolvable:$true] %s23
      %26 = dma.hbm_to_vmem [thread:$0]  %s0, 768, %s24, [#allocation4]
    $region5: #{tpu_custom_call.1} parent=1 // pred_fallthru
      _
    // Predicated region
    $region6: #{tpu_custom_call.1} parent=1 // pred_check
      _
    $region7: #{tpu_custom_call.1} parent=1 // pred_check_branch
      %28 = sbr.rel (0) target = $region9
    $region8: #{tpu_custom_call.1} parent=1 // pred_region
      %s30 = ssub.s32 24576, 24576
      %31 = vsyncadd [#allocation7], %s30
      %s32 = sshll.u32 [#allocation6], 4
      %s33 = int_to_ptr.vmem [resolvable:$true] %s32
      %38 = dma.hbm_to_vmem [thread:$0]  %s1, 24576, %s33, [#allocation7], 256, 256, 16
    $region9: #{tpu_custom_call.1} parent=1 // pred_fallthru
      _
    // Predicated region
    $region10: #{tpu_custom_call.1} parent=1 // pred_check
      _
    $region11: #{tpu_custom_call.1} parent=1 // pred_check_branch
      %40 = sbr.rel (0) target = $region13
    $region12: #{tpu_custom_call.1} parent=1 // pred_region
      _
    $region13: #{tpu_custom_call.1} parent=1 // pred_fallthru
      _
    // Predicated region
    $region14: #{tpu_custom_call.1} parent=1 // pred_check
      _
    $region15: #{tpu_custom_call.1} parent=1 // pred_check_branch
      %42 = sbr.rel (0) target = $region17
    $region16: #{tpu_custom_call.1} parent=1 // pred_region
      %s44 = ssub.s32 8192, 8192
      %45 = vsyncadd [#allocation7], %s44
      %s46 = sshll.u32 [#allocation8], 4
      %s47 = int_to_ptr.vmem [resolvable:$true] %s46
      %52 = dma.hbm_to_vmem [thread:$0]  %s3, 8192, %s47, [#allocation7], 128, 128, 8
    $region17: #{tpu_custom_call.1} parent=1 // pred_fallthru
      _
    // Predicated region
    $region18: #{tpu_custom_call.1} parent=1 // pred_check
      _
    $region19: #{tpu_custom_call.1} parent=1 // pred_check_branch
      %54 = sbr.rel (0) target = $region21
    $region20: #{tpu_custom_call.1} parent=1 // pred_region
      _
    $region21: #{tpu_custom_call.1} parent=1 // pred_fallthru
      _
    // Predicated region
    $region22: #{tpu_custom_call.1} parent=1 // pred_check
      _
    $region23: #{tpu_custom_call.1} parent=1 // pred_check_branch
      %56 = sbr.rel (0) target = $region25
    $region24: #{tpu_custom_call.1} parent=1 // pred_region
      _
    $region25: #{tpu_custom_call.1} parent=1 // pred_fallthru
      _
    // Predicated region
    $region26: #{tpu_custom_call.1} parent=1 // pred_check
      _
    $region27: #{tpu_custom_call.1} parent=1 // pred_check_branch
      %58 = sbr.rel (0) target = $region29
    $region28: #{tpu_custom_call.1} parent=1 // pred_region
      _
    $region29: #{tpu_custom_call.1} parent=1 // pred_fallthru
      _
    // Predicated region
    $region30: #{tpu_custom_call.1} parent=1 // pred_check
      _
    $region31: #{tpu_custom_call.1} parent=1 // pred_check_branch
      %60 = sbr.rel (0) target = $region33
    $region32: #{tpu_custom_call.1} parent=1 // pred_region
      %61 = dma.done [#allocation4], 768
    $region33: #{tpu_custom_call.1} parent=1 // pred_fallthru
      _
    // Predicated region
    $region34: #{tpu_custom_call.1} parent=1 // pred_check
      _
    $region35: #{tpu_custom_call.1} parent=1 // pred_check_branch
      %63 = sbr.rel (0) target = $region37
    $region36: #{tpu_custom_call.1} parent=1 // pred_region
      %64 = dma.done [#allocation7], 24576
    $region37: #{tpu_custom_call.1} parent=1 // pred_fallthru
      _
    // Predicated region
    $region38: #{tpu_custom_call.1} parent=1 // pred_check
      _
    $region39: #{tpu_custom_call.1} parent=1 // pred_check_branch
      %66 = sbr.rel (0) target = $region41
    $region40: #{tpu_custom_call.1} parent=1 // pred_region
      %67 = dma.done [#allocation7], 8192
    $region41: #{tpu_custom_call.1} parent=1 // pred_fallthru
      _
    %v69 = vld [vmem:[#allocation3] sm:$0xff]
    %v70 = vld [vmem:[#allocation3 + $0x8] sm:$0xff]
    %v71 = vld [vmem:[#allocation3 + $0x10] sm:$0xff]
    %v72 = vld [vmem:[#allocation3 + $0x18] sm:$0xff]
    %v73 = vld [vmem:[#allocation3 + $0x20] sm:$0xff]
    %v74 = vld [vmem:[#allocation3 + $0x28] sm:$0xff]
    %v75 = vpack.c.bf16 %v69, %v69
    %v76 = vpack.c.bf16 %v70, %v70
    %v77 = vpack.c.bf16 %v71, %v71
    %v78 = vpack.c.bf16 %v72, %v72
    %v79 = vpack.c.bf16 %v73, %v73
    %v80 = vpack.c.bf16 %v74, %v74
    %v81 = vld [vmem:[#allocation6] sm:$0xff]
    %v82 = vld [vmem:[#allocation6 + $0x8] sm:$0xff]
    %v83 = vld [vmem:[#allocation6 + $0x10] sm:$0xff]
    %v84 = vld [vmem:[#allocation6 + $0x18] sm:$0xff]
    %v85 = vld [vmem:[#allocation6 + $0x20] sm:$0xff]
    %v86 = vld [vmem:[#allocation6 + $0x28] sm:$0xff]
    %v87 = vld [vmem:[#allocation6 + $0x30] sm:$0xff]
    %v88 = vld [vmem:[#allocation6 + $0x38] sm:$0xff]
    %v89 = vld [vmem:[#allocation6 + $0x40] sm:$0xff]
    %v90 = vld [vmem:[#allocation6 + $0x48] sm:$0xff]
    %v91 = vld [vmem:[#allocation6 + $0x50] sm:$0xff]
    %v92 = vld [vmem:[#allocation6 + $0x58] sm:$0xff]
    %v93 = vld [vmem:[#allocation6 + $0x60] sm:$0xff]
    %v94 = vld [vmem:[#allocation6 + $0x68] sm:$0xff]
    %v95 = vld [vmem:[#allocation6 + $0x70] sm:$0xff]
    %v96 = vld [vmem:[#allocation6 + $0x78] sm:$0xff]
    %v97 = vld [vmem:[#allocation6 + $0x80] sm:$0xff]
    %v98 = vld [vmem:[#allocation6 + $0x88] sm:$0xff]
    %v99 = vld [vmem:[#allocation6 + $0x90] sm:$0xff]
    %v100 = vld [vmem:[#allocation6 + $0x98] sm:$0xff]
    %v101 = vld [vmem:[#allocation6 + $0xa0] sm:$0xff]
    %v102 = vld [vmem:[#allocation6 + $0xa8] sm:$0xff]
    %v103 = vld [vmem:[#allocation6 + $0xb0] sm:$0xff]
    %v104 = vld [vmem:[#allocation6 + $0xb8] sm:$0xff]
    %v105 = vld [vmem:[#allocation6 + $0xc0] sm:$0xff]
    %v106 = vld [vmem:[#allocation6 + $0xc8] sm:$0xff]
    %v107 = vld [vmem:[#allocation6 + $0xd0] sm:$0xff]
    %v108 = vld [vmem:[#allocation6 + $0xd8] sm:$0xff]
    %v109 = vld [vmem:[#allocation6 + $0xe0] sm:$0xff]
    %v110 = vld [vmem:[#allocation6 + $0xe8] sm:$0xff]
    %v111 = vld [vmem:[#allocation6 + $0xf0] sm:$0xff]
    %v112 = vld [vmem:[#allocation6 + $0xf8] sm:$0xff]
    %v113 = vld [vmem:[#allocation6 + $0x100] sm:$0xff]
    %v114 = vld [vmem:[#allocation6 + $0x108] sm:$0xff]
    %v115 = vld [vmem:[#allocation6 + $0x110] sm:$0xff]
    %v116 = vld [vmem:[#allocation6 + $0x118] sm:$0xff]
    %v117 = vld [vmem:[#allocation6 + $0x120] sm:$0xff]
    %v118 = vld [vmem:[#allocation6 + $0x128] sm:$0xff]
    %v119 = vld [vmem:[#allocation6 + $0x130] sm:$0xff]
    %v120 = vld [vmem:[#allocation6 + $0x138] sm:$0xff]
    %v121 = vld [vmem:[#allocation6 + $0x140] sm:$0xff]
    %v122 = vld [vmem:[#allocation6 + $0x148] sm:$0xff]
    %v123 = vld [vmem:[#allocation6 + $0x150] sm:$0xff]
    %v124 = vld [vmem:[#allocation6 + $0x158] sm:$0xff]
    %v125 = vld [vmem:[#allocation6 + $0x160] sm:$0xff]
    %v126 = vld [vmem:[#allocation6 + $0x168] sm:$0xff]
    %v127 = vld [vmem:[#allocation6 + $0x170] sm:$0xff]
    %v128 = vld [vmem:[#allocation6 + $0x178] sm:$0xff]
    %v129 = vld [vmem:[#allocation6 + $0x180] sm:$0xff]
    %v130 = vld [vmem:[#allocation6 + $0x188] sm:$0xff]
    %v131 = vld [vmem:[#allocation6 + $0x190] sm:$0xff]
    %v132 = vld [vmem:[#allocation6 + $0x198] sm:$0xff]
    %v133 = vld [vmem:[#allocation6 + $0x1a0] sm:$0xff]
    %v134 = vld [vmem:[#allocation6 + $0x1a8] sm:$0xff]
    %v135 = vld [vmem:[#allocation6 + $0x1b0] sm:$0xff]
    %v136 = vld [vmem:[#allocation6 + $0x1b8] sm:$0xff]
    %v137 = vld [vmem:[#allocation6 + $0x1c0] sm:$0xff]
    %v138 = vld [vmem:[#allocation6 + $0x1c8] sm:$0xff]
    %v139 = vld [vmem:[#allocation6 + $0x1d0] sm:$0xff]
    %v140 = vld [vmem:[#allocation6 + $0x1d8] sm:$0xff]
    %v141 = vld [vmem:[#allocation6 + $0x1e0] sm:$0xff]
    %v142 = vld [vmem:[#allocation6 + $0x1e8] sm:$0xff]
    %v143 = vld [vmem:[#allocation6 + $0x1f0] sm:$0xff]
    %v144 = vld [vmem:[#allocation6 + $0x1f8] sm:$0xff]
    %v145 = vld [vmem:[#allocation6 + $0x200] sm:$0xff]
    %v146 = vld [vmem:[#allocation6 + $0x208] sm:$0xff]
    %v147 = vld [vmem:[#allocation6 + $0x210] sm:$0xff]
    %v148 = vld [vmem:[#allocation6 + $0x218] sm:$0xff]
    %v149 = vld [vmem:[#allocation6 + $0x220] sm:$0xff]
    %v150 = vld [vmem:[#allocation6 + $0x228] sm:$0xff]
    %v151 = vld [vmem:[#allocation6 + $0x230] sm:$0xff]
    %v152 = vld [vmem:[#allocation6 + $0x238] sm:$0xff]
    %v153 = vld [vmem:[#allocation6 + $0x240] sm:$0xff]
    %v154 = vld [vmem:[#allocation6 + $0x248] sm:$0xff]
    %v155 = vld [vmem:[#allocation6 + $0x250] sm:$0xff]
    %v156 = vld [vmem:[#allocation6 + $0x258] sm:$0xff]
    %v157 = vld [vmem:[#allocation6 + $0x260] sm:$0xff]
    %v158 = vld [vmem:[#allocation6 + $0x268] sm:$0xff]
    %v159 = vld [vmem:[#allocation6 + $0x270] sm:$0xff]
    %v160 = vld [vmem:[#allocation6 + $0x278] sm:$0xff]
    %v161 = vld [vmem:[#allocation6 + $0x280] sm:$0xff]
    %v162 = vld [vmem:[#allocation6 + $0x288] sm:$0xff]
    %v163 = vld [vmem:[#allocation6 + $0x290] sm:$0xff]
    %v164 = vld [vmem:[#allocation6 + $0x298] sm:$0xff]
    %v165 = vld [vmem:[#allocation6 + $0x2a0] sm:$0xff]
    %v166 = vld [vmem:[#allocation6 + $0x2a8] sm:$0xff]
    %v167 = vld [vmem:[#allocation6 + $0x2b0] sm:$0xff]
    %v168 = vld [vmem:[#allocation6 + $0x2b8] sm:$0xff]
    %v169 = vld [vmem:[#allocation6 + $0x2c0] sm:$0xff]
    %v170 = vld [vmem:[#allocation6 + $0x2c8] sm:$0xff]
    %v171 = vld [vmem:[#allocation6 + $0x2d0] sm:$0xff]
    %v172 = vld [vmem:[#allocation6 + $0x2d8] sm:$0xff]
    %v173 = vld [vmem:[#allocation6 + $0x2e0] sm:$0xff]
    %v174 = vld [vmem:[#allocation6 + $0x2e8] sm:$0xff]
    %v175 = vld [vmem:[#allocation6 + $0x2f0] sm:$0xff]
    %v176 = vld [vmem:[#allocation6 + $0x2f8] sm:$0xff]
    %v177 = vld [vmem:[#allocation6 + $0x300] sm:$0xff]
    %v178 = vld [vmem:[#allocation6 + $0x308] sm:$0xff]
    %v179 = vld [vmem:[#allocation6 + $0x310] sm:$0xff]
    %v180 = vld [vmem:[#allocation6 + $0x318] sm:$0xff]
    %v181 = vld [vmem:[#allocation6 + $0x320] sm:$0xff]
    %v182 = vld [vmem:[#allocation6 + $0x328] sm:$0xff]
    %v183 = vld [vmem:[#allocation6 + $0x330] sm:$0xff]
    %v184 = vld [vmem:[#allocation6 + $0x338] sm:$0xff]
    %v185 = vld [vmem:[#allocation6 + $0x340] sm:$0xff]
    %v186 = vld [vmem:[#allocation6 + $0x348] sm:$0xff]
    %v187 = vld [vmem:[#allocation6 + $0x350] sm:$0xff]
    %v188 = vld [vmem:[#allocation6 + $0x358] sm:$0xff]
    %v189 = vld [vmem:[#allocation6 + $0x360] sm:$0xff]
    %v190 = vld [vmem:[#allocation6 + $0x368] sm:$0xff]
    %v191 = vld [vmem:[#allocation6 + $0x370] sm:$0xff]
    %v192 = vld [vmem:[#allocation6 + $0x378] sm:$0xff]
    %v193 = vld [vmem:[#allocation6 + $0x380] sm:$0xff]
    %v194 = vld [vmem:[#allocation6 + $0x388] sm:$0xff]
    %v195 = vld [vmem:[#allocation6 + $0x390] sm:$0xff]
    %v196 = vld [vmem:[#allocation6 + $0x398] sm:$0xff]
    %v197 = vld [vmem:[#allocation6 + $0x3a0] sm:$0xff]
    %v198 = vld [vmem:[#allocation6 + $0x3a8] sm:$0xff]
    %v199 = vld [vmem:[#allocation6 + $0x3b0] sm:$0xff]
    %v200 = vld [vmem:[#allocation6 + $0x3b8] sm:$0xff]
    %v201 = vld [vmem:[#allocation6 + $0x3c0] sm:$0xff]
    %v202 = vld [vmem:[#allocation6 + $0x3c8] sm:$0xff]
    %v203 = vld [vmem:[#allocation6 + $0x3d0] sm:$0xff]
    %v204 = vld [vmem:[#allocation6 + $0x3d8] sm:$0xff]
    %v205 = vld [vmem:[#allocation6 + $0x3e0] sm:$0xff]
    %v206 = vld [vmem:[#allocation6 + $0x3e8] sm:$0xff]
    %v207 = vld [vmem:[#allocation6 + $0x3f0] sm:$0xff]
    %v208 = vld [vmem:[#allocation6 + $0x3f8] sm:$0xff]
    %v209 = vld [vmem:[#allocation6 + $0x400] sm:$0xff]
    %v210 = vld [vmem:[#allocation6 + $0x408] sm:$0xff]
    %v211 = vld [vmem:[#allocation6 + $0x410] sm:$0xff]
    %v212 = vld [vmem:[#allocation6 + $0x418] sm:$0xff]
    %v213 = vld [vmem:[#allocation6 + $0x420] sm:$0xff]
    %v214 = vld [vmem:[#allocation6 + $0x428] sm:$0xff]
    %v215 = vld [vmem:[#allocation6 + $0x430] sm:$0xff]
    %v216 = vld [vmem:[#allocation6 + $0x438] sm:$0xff]
    %v217 = vld [vmem:[#allocation6 + $0x440] sm:$0xff]
    %v218 = vld [vmem:[#allocation6 + $0x448] sm:$0xff]
    %v219 = vld [vmem:[#allocation6 + $0x450] sm:$0xff]
    %v220 = vld [vmem:[#allocation6 + $0x458] sm:$0xff]
    %v221 = vld [vmem:[#allocation6 + $0x460] sm:$0xff]
    %v222 = vld [vmem:[#allocation6 + $0x468] sm:$0xff]
    %v223 = vld [vmem:[#allocation6 + $0x470] sm:$0xff]
    %v224 = vld [vmem:[#allocation6 + $0x478] sm:$0xff]
    %v225 = vld [vmem:[#allocation6 + $0x480] sm:$0xff]
    %v226 = vld [vmem:[#allocation6 + $0x488] sm:$0xff]
    %v227 = vld [vmem:[#allocation6 + $0x490] sm:$0xff]
    %v228 = vld [vmem:[#allocation6 + $0x498] sm:$0xff]
    %v229 = vld [vmem:[#allocation6 + $0x4a0] sm:$0xff]
    %v230 = vld [vmem:[#allocation6 + $0x4a8] sm:$0xff]
    %v231 = vld [vmem:[#allocation6 + $0x4b0] sm:$0xff]
    %v232 = vld [vmem:[#allocation6 + $0x4b8] sm:$0xff]
    %v233 = vld [vmem:[#allocation6 + $0x4c0] sm:$0xff]
    %v234 = vld [vmem:[#allocation6 + $0x4c8] sm:$0xff]
    %v235 = vld [vmem:[#allocation6 + $0x4d0] sm:$0xff]
    %v236 = vld [vmem:[#allocation6 + $0x4d8] sm:$0xff]
    %v237 = vld [vmem:[#allocation6 + $0x4e0] sm:$0xff]
    %v238 = vld [vmem:[#allocation6 + $0x4e8] sm:$0xff]
    %v239 = vld [vmem:[#allocation6 + $0x4f0] sm:$0xff]
    %v240 = vld [vmem:[#allocation6 + $0x4f8] sm:$0xff]
    %v241 = vld [vmem:[#allocation6 + $0x500] sm:$0xff]
    %v242 = vld [vmem:[#allocation6 + $0x508] sm:$0xff]
    %v243 = vld [vmem:[#allocation6 + $0x510] sm:$0xff]
    %v244 = vld [vmem:[#allocation6 + $0x518] sm:$0xff]
    %v245 = vld [vmem:[#allocation6 + $0x520] sm:$0xff]
    %v246 = vld [vmem:[#allocation6 + $0x528] sm:$0xff]
    %v247 = vld [vmem:[#allocation6 + $0x530] sm:$0xff]
    %v248 = vld [vmem:[#allocation6 + $0x538] sm:$0xff]
    %v249 = vld [vmem:[#allocation6 + $0x540] sm:$0xff]
    %v250 = vld [vmem:[#allocation6 + $0x548] sm:$0xff]
    %v251 = vld [vmem:[#allocation6 + $0x550] sm:$0xff]
    %v252 = vld [vmem:[#allocation6 + $0x558] sm:$0xff]
    %v253 = vld [vmem:[#allocation6 + $0x560] sm:$0xff]
    %v254 = vld [vmem:[#allocation6 + $0x568] sm:$0xff]
    %v255 = vld [vmem:[#allocation6 + $0x570] sm:$0xff]
    %v256 = vld [vmem:[#allocation6 + $0x578] sm:$0xff]
    %v257 = vld [vmem:[#allocation6 + $0x580] sm:$0xff]
    %v258 = vld [vmem:[#allocation6 + $0x588] sm:$0xff]
    %v259 = vld [vmem:[#allocation6 + $0x590] sm:$0xff]
    %v260 = vld [vmem:[#allocation6 + $0x598] sm:$0xff]
    %v261 = vld [vmem:[#allocation6 + $0x5a0] sm:$0xff]
    %v262 = vld [vmem:[#allocation6 + $0x5a8] sm:$0xff]
    %v263 = vld [vmem:[#allocation6 + $0x5b0] sm:$0xff]
    %v264 = vld [vmem:[#allocation6 + $0x5b8] sm:$0xff]
    %v265 = vld [vmem:[#allocation6 + $0x5c0] sm:$0xff]
    %v266 = vld [vmem:[#allocation6 + $0x5c8] sm:$0xff]
    %v267 = vld [vmem:[#allocation6 + $0x5d0] sm:$0xff]
    %v268 = vld [vmem:[#allocation6 + $0x5d8] sm:$0xff]
    %v269 = vld [vmem:[#allocation6 + $0x5e0] sm:$0xff]
    %v270 = vld [vmem:[#allocation6 + $0x5e8] sm:$0xff]
    %v271 = vld [vmem:[#allocation6 + $0x5f0] sm:$0xff]
    %v272 = vld [vmem:[#allocation6 + $0x5f8] sm:$0xff]
    %v273 = vld [vmem:[%s2] sm:$0xf]
    %v275 = vlaneseq
    %v276 = vshrl.u32 %v275, 7
    %v277 = vsub.s32 0, %v276
    %v278 = vrot.slane %v273, %v277
    %v279 = vlaneseq
    %v280 = vshrl.u32 %v279, 7
    %v281 = vsub.s32 1, %v280
    %v282 = vrot.slane %v273, %v281
    %v283 = vlaneseq
    %v284 = vshrl.u32 %v283, 7
    %v285 = vsub.s32 2, %v284
    %v286 = vrot.slane %v273, %v285
    %v287 = vlaneseq
    %v288 = vshrl.u32 %v287, 7
    %v289 = vsub.s32 3, %v288
    %v290 = vrot.slane %v273, %v289
    %v487 = vunpack.c.l.b16 %v81
    %v488 = vunpack.c.h.b16 %v81
    %v489 = vunpack.c.l.b16 %v82
    %v490 = vunpack.c.h.b16 %v82
    %v491 = vunpack.c.l.b16 %v83
    %v492 = vunpack.c.h.b16 %v83
    %v493 = vunpack.c.l.b16 %v84
    %v494 = vunpack.c.h.b16 %v84
    %v495 = vunpack.c.l.b16 %v85
    %v496 = vunpack.c.h.b16 %v85
    %v497 = vunpack.c.l.b16 %v86
    %v498 = vunpack.c.h.b16 %v86
    %v499 = vunpack.c.l.b16 %v87
    %v500 = vunpack.c.h.b16 %v87
    %v501 = vunpack.c.l.b16 %v88
    %v502 = vunpack.c.h.b16 %v88
    %v503 = vunpack.c.l.b16 %v89
    %v504 = vunpack.c.h.b16 %v89
    %v505 = vunpack.c.l.b16 %v90
    %v506 = vunpack.c.h.b16 %v90
    %v507 = vunpack.c.l.b16 %v91
    %v508 = vunpack.c.h.b16 %v91
    %v509 = vunpack.c.l.b16 %v92
    %v510 = vunpack.c.h.b16 %v92
    %v511 = vunpack.c.l.b16 %v93
    %v512 = vunpack.c.h.b16 %v93
    %v513 = vunpack.c.l.b16 %v94
    %v514 = vunpack.c.h.b16 %v94
    %v515 = vunpack.c.l.b16 %v95
    %v516 = vunpack.c.h.b16 %v95
    %v517 = vunpack.c.l.b16 %v96
    %v518 = vunpack.c.h.b16 %v96
    %v519 = vunpack.c.l.b16 %v97
    %v520 = vunpack.c.h.b16 %v97
    %v521 = vunpack.c.l.b16 %v98
    %v522 = vunpack.c.h.b16 %v98
    %v523 = vunpack.c.l.b16 %v99
    %v524 = vunpack.c.h.b16 %v99
    %v525 = vunpack.c.l.b16 %v100
    %v526 = vunpack.c.h.b16 %v100
    %v527 = vunpack.c.l.b16 %v101
    %v528 = vunpack.c.h.b16 %v101
    %v529 = vunpack.c.l.b16 %v102
    %v530 = vunpack.c.h.b16 %v102
    %v531 = vunpack.c.l.b16 %v103
    %v532 = vunpack.c.h.b16 %v103
    %v533 = vunpack.c.l.b16 %v104
    %v534 = vunpack.c.h.b16 %v104
    %v535 = vunpack.c.l.b16 %v105
    %v536 = vunpack.c.h.b16 %v105
    %v537 = vunpack.c.l.b16 %v106
    %v538 = vunpack.c.h.b16 %v106
    %v539 = vunpack.c.l.b16 %v107
    %v540 = vunpack.c.h.b16 %v107
    %v541 = vunpack.c.l.b16 %v108
    %v542 = vunpack.c.h.b16 %v108
    %v543 = vunpack.c.l.b16 %v109
    %v544 = vunpack.c.h.b16 %v109
    %v545 = vunpack.c.l.b16 %v110
    %v546 = vunpack.c.h.b16 %v110
    %v547 = vunpack.c.l.b16 %v111
    %v548 = vunpack.c.h.b16 %v111
    %v549 = vunpack.c.l.b16 %v112
    %v550 = vunpack.c.h.b16 %v112
    %v551 = vunpack.c.l.b16 %v113
    %v552 = vunpack.c.h.b16 %v113
    %v553 = vunpack.c.l.b16 %v114
    %v554 = vunpack.c.h.b16 %v114
    %v555 = vunpack.c.l.b16 %v115
    %v556 = vunpack.c.h.b16 %v115
    %v557 = vunpack.c.l.b16 %v116
    %v558 = vunpack.c.h.b16 %v116
    %v559 = vunpack.c.l.b16 %v117
    %v560 = vunpack.c.h.b16 %v117
    %v561 = vunpack.c.l.b16 %v118
    %v562 = vunpack.c.h.b16 %v118
    %v563 = vunpack.c.l.b16 %v119
    %v564 = vunpack.c.h.b16 %v119
    %v565 = vunpack.c.l.b16 %v120
    %v566 = vunpack.c.h.b16 %v120
    %v567 = vunpack.c.l.b16 %v121
    %v568 = vunpack.c.h.b16 %v121
    %v569 = vunpack.c.l.b16 %v122
    %v570 = vunpack.c.h.b16 %v122
    %v571 = vunpack.c.l.b16 %v123
    %v572 = vunpack.c.h.b16 %v123
    %v573 = vunpack.c.l.b16 %v124
    %v574 = vunpack.c.h.b16 %v124
    %v575 = vunpack.c.l.b16 %v125
    %v576 = vunpack.c.h.b16 %v125
    %v577 = vunpack.c.l.b16 %v126
    %v578 = vunpack.c.h.b16 %v126
    %v579 = vunpack.c.l.b16 %v127
    %v580 = vunpack.c.h.b16 %v127
    %v581 = vunpack.c.l.b16 %v128
    %v582 = vunpack.c.h.b16 %v128
    %v583 = vunpack.c.l.b16 %v129
    %v584 = vunpack.c.h.b16 %v129
    %v585 = vunpack.c.l.b16 %v130
    %v586 = vunpack.c.h.b16 %v130
    %v587 = vunpack.c.l.b16 %v131
    %v588 = vunpack.c.h.b16 %v131
    %v589 = vunpack.c.l.b16 %v132
    %v590 = vunpack.c.h.b16 %v132
    %v591 = vunpack.c.l.b16 %v133
    %v592 = vunpack.c.h.b16 %v133
    %v593 = vunpack.c.l.b16 %v134
    %v594 = vunpack.c.h.b16 %v134
    %v595 = vunpack.c.l.b16 %v135
    %v596 = vunpack.c.h.b16 %v135
    %v597 = vunpack.c.l.b16 %v136
    %v598 = vunpack.c.h.b16 %v136
    %v599 = vunpack.c.l.b16 %v137
    %v600 = vunpack.c.h.b16 %v137
    %v601 = vunpack.c.l.b16 %v138
    %v602 = vunpack.c.h.b16 %v138
    %v603 = vunpack.c.l.b16 %v139
    %v604 = vunpack.c.h.b16 %v139
    %v605 = vunpack.c.l.b16 %v140
    %v606 = vunpack.c.h.b16 %v140
    %v607 = vunpack.c.l.b16 %v141
    %v608 = vunpack.c.h.b16 %v141
    %v609 = vunpack.c.l.b16 %v142
    %v610 = vunpack.c.h.b16 %v142
    %v611 = vunpack.c.l.b16 %v143
    %v612 = vunpack.c.h.b16 %v143
    %v613 = vunpack.c.l.b16 %v144
    %v614 = vunpack.c.h.b16 %v144
    %v615 = vunpack.c.l.b16 %v145
    %v616 = vunpack.c.h.b16 %v145
    %v617 = vunpack.c.l.b16 %v146
    %v618 = vunpack.c.h.b16 %v146
    %v619 = vunpack.c.l.b16 %v147
    %v620 = vunpack.c.h.b16 %v147
    %v621 = vunpack.c.l.b16 %v148
    %v622 = vunpack.c.h.b16 %v148
    %v623 = vunpack.c.l.b16 %v149
    %v624 = vunpack.c.h.b16 %v149
    %v625 = vunpack.c.l.b16 %v150
    %v626 = vunpack.c.h.b16 %v150
    %v627 = vunpack.c.l.b16 %v151
    %v628 = vunpack.c.h.b16 %v151
    %v629 = vunpack.c.l.b16 %v152
    %v630 = vunpack.c.h.b16 %v152
    %v631 = vunpack.c.l.b16 %v153
    %v632 = vunpack.c.h.b16 %v153
    %v633 = vunpack.c.l.b16 %v154
    %v634 = vunpack.c.h.b16 %v154
    %v635 = vunpack.c.l.b16 %v155
    %v636 = vunpack.c.h.b16 %v155
    %v637 = vunpack.c.l.b16 %v156
    %v638 = vunpack.c.h.b16 %v156
    %v639 = vunpack.c.l.b16 %v157
    %v640 = vunpack.c.h.b16 %v157
    %v641 = vunpack.c.l.b16 %v158
    %v642 = vunpack.c.h.b16 %v158
    %v643 = vunpack.c.l.b16 %v159
    %v644 = vunpack.c.h.b16 %v159
    %v645 = vunpack.c.l.b16 %v160
    %v646 = vunpack.c.h.b16 %v160
    %v647 = vunpack.c.l.b16 %v161
    %v648 = vunpack.c.h.b16 %v161
    %v649 = vunpack.c.l.b16 %v162
    %v650 = vunpack.c.h.b16 %v162
    %v651 = vunpack.c.l.b16 %v163
    %v652 = vunpack.c.h.b16 %v163
    %v653 = vunpack.c.l.b16 %v164
    %v654 = vunpack.c.h.b16 %v164
    %v655 = vunpack.c.l.b16 %v165
    %v656 = vunpack.c.h.b16 %v165
    %v657 = vunpack.c.l.b16 %v166
    %v658 = vunpack.c.h.b16 %v166
    %v659 = vunpack.c.l.b16 %v167
    %v660 = vunpack.c.h.b16 %v167
    %v661 = vunpack.c.l.b16 %v168
    %v662 = vunpack.c.h.b16 %v168
    %v663 = vunpack.c.l.b16 %v169
    %v664 = vunpack.c.h.b16 %v169
    %v665 = vunpack.c.l.b16 %v170
    %v666 = vunpack.c.h.b16 %v170
    %v667 = vunpack.c.l.b16 %v171
    %v668 = vunpack.c.h.b16 %v171
    %v669 = vunpack.c.l.b16 %v172
    %v670 = vunpack.c.h.b16 %v172
    %v671 = vunpack.c.l.b16 %v173
    %v672 = vunpack.c.h.b16 %v173
    %v673 = vunpack.c.l.b16 %v174
    %v674 = vunpack.c.h.b16 %v174
    %v675 = vunpack.c.l.b16 %v175
    %v676 = vunpack.c.h.b16 %v175
    %v677 = vunpack.c.l.b16 %v176
    %v678 = vunpack.c.h.b16 %v176
    %v679 = vunpack.c.l.b16 %v177
    %v680 = vunpack.c.h.b16 %v177
    %v681 = vunpack.c.l.b16 %v178
    %v682 = vunpack.c.h.b16 %v178
    %v683 = vunpack.c.l.b16 %v179
    %v684 = vunpack.c.h.b16 %v179
    %v685 = vunpack.c.l.b16 %v180
    %v686 = vunpack.c.h.b16 %v180
    %v687 = vunpack.c.l.b16 %v181
    %v688 = vunpack.c.h.b16 %v181
    %v689 = vunpack.c.l.b16 %v182
    %v690 = vunpack.c.h.b16 %v182
    %v691 = vunpack.c.l.b16 %v183
    %v692 = vunpack.c.h.b16 %v183
    %v693 = vunpack.c.l.b16 %v184
    %v694 = vunpack.c.h.b16 %v184
    %v695 = vunpack.c.l.b16 %v185
    %v696 = vunpack.c.h.b16 %v185
    %v697 = vunpack.c.l.b16 %v186
    %v698 = vunpack.c.h.b16 %v186
    %v699 = vunpack.c.l.b16 %v187
    %v700 = vunpack.c.h.b16 %v187
    %v701 = vunpack.c.l.b16 %v188
    %v702 = vunpack.c.h.b16 %v188
    %v703 = vunpack.c.l.b16 %v189
    %v704 = vunpack.c.h.b16 %v189
    %v705 = vunpack.c.l.b16 %v190
    %v706 = vunpack.c.h.b16 %v190
    %v707 = vunpack.c.l.b16 %v191
    %v708 = vunpack.c.h.b16 %v191
    %v709 = vunpack.c.l.b16 %v192
    %v710 = vunpack.c.h.b16 %v192
    %v711 = vunpack.c.l.b16 %v193
    %v712 = vunpack.c.h.b16 %v193
    %v713 = vunpack.c.l.b16 %v194
    %v714 = vunpack.c.h.b16 %v194
    %v715 = vunpack.c.l.b16 %v195
    %v716 = vunpack.c.h.b16 %v195
    %v717 = vunpack.c.l.b16 %v196
    %v718 = vunpack.c.h.b16 %v196
    %v719 = vunpack.c.l.b16 %v197
    %v720 = vunpack.c.h.b16 %v197
    %v721 = vunpack.c.l.b16 %v198
    %v722 = vunpack.c.h.b16 %v198
    %v723 = vunpack.c.l.b16 %v199
    %v724 = vunpack.c.h.b16 %v199
    %v725 = vunpack.c.l.b16 %v200
    %v726 = vunpack.c.h.b16 %v200
    %v727 = vunpack.c.l.b16 %v201
    %v728 = vunpack.c.h.b16 %v201
    %v729 = vunpack.c.l.b16 %v202
    %v730 = vunpack.c.h.b16 %v202
    %v731 = vunpack.c.l.b16 %v203
    %v732 = vunpack.c.h.b16 %v203
    %v733 = vunpack.c.l.b16 %v204
    %v734 = vunpack.c.h.b16 %v204
    %v735 = vunpack.c.l.b16 %v205
    %v736 = vunpack.c.h.b16 %v205
    %v737 = vunpack.c.l.b16 %v206
    %v738 = vunpack.c.h.b16 %v206
    %v739 = vunpack.c.l.b16 %v207
    %v740 = vunpack.c.h.b16 %v207
    %v741 = vunpack.c.l.b16 %v208
    %v742 = vunpack.c.h.b16 %v208
    %v743 = vunpack.c.l.b16 %v209
    %v744 = vunpack.c.h.b16 %v209
    %v745 = vunpack.c.l.b16 %v210
    %v746 = vunpack.c.h.b16 %v210
    %v747 = vunpack.c.l.b16 %v211
    %v748 = vunpack.c.h.b16 %v211
    %v749 = vunpack.c.l.b16 %v212
    %v750 = vunpack.c.h.b16 %v212
    %v751 = vunpack.c.l.b16 %v213
    %v752 = vunpack.c.h.b16 %v213
    %v753 = vunpack.c.l.b16 %v214
    %v754 = vunpack.c.h.b16 %v214
    %v755 = vunpack.c.l.b16 %v215
    %v756 = vunpack.c.h.b16 %v215
    %v757 = vunpack.c.l.b16 %v216
    %v758 = vunpack.c.h.b16 %v216
    %v759 = vunpack.c.l.b16 %v217
    %v760 = vunpack.c.h.b16 %v217
    %v761 = vunpack.c.l.b16 %v218
    %v762 = vunpack.c.h.b16 %v218
    %v763 = vunpack.c.l.b16 %v219
    %v764 = vunpack.c.h.b16 %v219
    %v765 = vunpack.c.l.b16 %v220
    %v766 = vunpack.c.h.b16 %v220
    %v767 = vunpack.c.l.b16 %v221
    %v768 = vunpack.c.h.b16 %v221
    %v769 = vunpack.c.l.b16 %v222
    %v770 = vunpack.c.h.b16 %v222
    %v771 = vunpack.c.l.b16 %v223
    %v772 = vunpack.c.h.b16 %v223
    %v773 = vunpack.c.l.b16 %v224
    %v774 = vunpack.c.h.b16 %v224
    %v775 = vunpack.c.l.b16 %v225
    %v776 = vunpack.c.h.b16 %v225
    %v777 = vunpack.c.l.b16 %v226
    %v778 = vunpack.c.h.b16 %v226
    %v779 = vunpack.c.l.b16 %v227
    %v780 = vunpack.c.h.b16 %v227
    %v781 = vunpack.c.l.b16 %v228
    %v782 = vunpack.c.h.b16 %v228
    %v783 = vunpack.c.l.b16 %v229
    %v784 = vunpack.c.h.b16 %v229
    %v785 = vunpack.c.l.b16 %v230
    %v786 = vunpack.c.h.b16 %v230
    %v787 = vunpack.c.l.b16 %v231
    %v788 = vunpack.c.h.b16 %v231
    %v789 = vunpack.c.l.b16 %v232
    %v790 = vunpack.c.h.b16 %v232
    %v791 = vunpack.c.l.b16 %v233
    %v792 = vunpack.c.h.b16 %v233
    %v793 = vunpack.c.l.b16 %v234
    %v794 = vunpack.c.h.b16 %v234
    %v795 = vunpack.c.l.b16 %v235
    %v796 = vunpack.c.h.b16 %v235
    %v797 = vunpack.c.l.b16 %v236
    %v798 = vunpack.c.h.b16 %v236
    %v799 = vunpack.c.l.b16 %v237
    %v800 = vunpack.c.h.b16 %v237
    %v801 = vunpack.c.l.b16 %v238
    %v802 = vunpack.c.h.b16 %v238
    %v803 = vunpack.c.l.b16 %v239
    %v804 = vunpack.c.h.b16 %v239
    %v805 = vunpack.c.l.b16 %v240
    %v806 = vunpack.c.h.b16 %v240
    %v807 = vunpack.c.l.b16 %v241
    %v808 = vunpack.c.h.b16 %v241
    %v809 = vunpack.c.l.b16 %v242
    %v810 = vunpack.c.h.b16 %v242
    %v811 = vunpack.c.l.b16 %v243
    %v812 = vunpack.c.h.b16 %v243
    %v813 = vunpack.c.l.b16 %v244
    %v814 = vunpack.c.h.b16 %v244
    %v815 = vunpack.c.l.b16 %v245
    %v816 = vunpack.c.h.b16 %v245
    %v817 = vunpack.c.l.b16 %v246
    %v818 = vunpack.c.h.b16 %v246
    %v819 = vunpack.c.l.b16 %v247
    %v820 = vunpack.c.h.b16 %v247
    %v821 = vunpack.c.l.b16 %v248
    %v822 = vunpack.c.h.b16 %v248
    %v823 = vunpack.c.l.b16 %v249
    %v824 = vunpack.c.h.b16 %v249
    %v825 = vunpack.c.l.b16 %v250
    %v826 = vunpack.c.h.b16 %v250
    %v827 = vunpack.c.l.b16 %v251
    %v828 = vunpack.c.h.b16 %v251
    %v829 = vunpack.c.l.b16 %v252
    %v830 = vunpack.c.h.b16 %v252
    %v831 = vunpack.c.l.b16 %v253
    %v832 = vunpack.c.h.b16 %v253
    %v833 = vunpack.c.l.b16 %v254
    %v834 = vunpack.c.h.b16 %v254
    %v835 = vunpack.c.l.b16 %v255
    %v836 = vunpack.c.h.b16 %v255
    %v837 = vunpack.c.l.b16 %v256
    %v838 = vunpack.c.h.b16 %v256
    %v839 = vunpack.c.l.b16 %v257
    %v840 = vunpack.c.h.b16 %v257
    %v841 = vunpack.c.l.b16 %v258
    %v842 = vunpack.c.h.b16 %v258
    %v843 = vunpack.c.l.b16 %v259
    %v844 = vunpack.c.h.b16 %v259
    %v845 = vunpack.c.l.b16 %v260
    %v846 = vunpack.c.h.b16 %v260
    %v847 = vunpack.c.l.b16 %v261
    %v848 = vunpack.c.h.b16 %v261
    %v849 = vunpack.c.l.b16 %v262
    %v850 = vunpack.c.h.b16 %v262
    %v851 = vunpack.c.l.b16 %v263
    %v852 = vunpack.c.h.b16 %v263
    %v853 = vunpack.c.l.b16 %v264
    %v854 = vunpack.c.h.b16 %v264
    %v855 = vunpack.c.l.b16 %v265
    %v856 = vunpack.c.h.b16 %v265
    %v857 = vunpack.c.l.b16 %v266
    %v858 = vunpack.c.h.b16 %v266
    %v859 = vunpack.c.l.b16 %v267
    %v860 = vunpack.c.h.b16 %v267
    %v861 = vunpack.c.l.b16 %v268
    %v862 = vunpack.c.h.b16 %v268
    %v863 = vunpack.c.l.b16 %v269
    %v864 = vunpack.c.h.b16 %v269
    %v865 = vunpack.c.l.b16 %v270
    %v866 = vunpack.c.h.b16 %v270
    %v867 = vunpack.c.l.b16 %v271
    %v868 = vunpack.c.h.b16 %v271
    %v869 = vunpack.c.l.b16 %v272
    %v870 = vunpack.c.h.b16 %v272
    %v871 = vpack.c.b16 %v491, %v487
    %v872 = vpack.c.b16 %v492, %v488
    %v873 = vpack.c.b16 %v493, %v489
    %v874 = vpack.c.b16 %v494, %v490
    %v875 = vpack.c.b16 %v499, %v495
    %v876 = vpack.c.b16 %v500, %v496
    %v877 = vpack.c.b16 %v501, %v497
    %v878 = vpack.c.b16 %v502, %v498
    %v879 = vpack.c.b16 %v507, %v503
    %v880 = vpack.c.b16 %v508, %v504
    %v881 = vpack.c.b16 %v509, %v505
    %v882 = vpack.c.b16 %v510, %v506
    %v883 = vpack.c.b16 %v515, %v511
    %v884 = vpack.c.b16 %v516, %v512
    %v885 = vpack.c.b16 %v517, %v513
    %v886 = vpack.c.b16 %v518, %v514
    %v887 = vpack.c.b16 %v523, %v519
    %v888 = vpack.c.b16 %v524, %v520
    %v889 = vpack.c.b16 %v525, %v521
    %v890 = vpack.c.b16 %v526, %v522
    %v891 = vpack.c.b16 %v531, %v527
    %v892 = vpack.c.b16 %v532, %v528
    %v893 = vpack.c.b16 %v533, %v529
    %v894 = vpack.c.b16 %v534, %v530
    %v895 = vpack.c.b16 %v539, %v535
    %v896 = vpack.c.b16 %v540, %v536
    %v897 = vpack.c.b16 %v541, %v537
    %v898 = vpack.c.b16 %v542, %v538
    %v899 = vpack.c.b16 %v547, %v543
    %v900 = vpack.c.b16 %v548, %v544
    %v901 = vpack.c.b16 %v549, %v545
    %v902 = vpack.c.b16 %v550, %v546
    %v903 = vpack.c.b16 %v555, %v551
    %v904 = vpack.c.b16 %v556, %v552
    %v905 = vpack.c.b16 %v557, %v553
    %v906 = vpack.c.b16 %v558, %v554
    %v907 = vpack.c.b16 %v563, %v559
    %v908 = vpack.c.b16 %v564, %v560
    %v909 = vpack.c.b16 %v565, %v561
    %v910 = vpack.c.b16 %v566, %v562
    %v911 = vpack.c.b16 %v571, %v567
    %v912 = vpack.c.b16 %v572, %v568
    %v913 = vpack.c.b16 %v573, %v569
    %v914 = vpack.c.b16 %v574, %v570
    %v915 = vpack.c.b16 %v579, %v575
    %v916 = vpack.c.b16 %v580, %v576
    %v917 = vpack.c.b16 %v581, %v577
    %v918 = vpack.c.b16 %v582, %v578
    %v919 = vpack.c.b16 %v587, %v583
    %v920 = vpack.c.b16 %v588, %v584
    %v921 = vpack.c.b16 %v589, %v585
    %v922 = vpack.c.b16 %v590, %v586
    %v923 = vpack.c.b16 %v595, %v591
    %v924 = vpack.c.b16 %v596, %v592
    %v925 = vpack.c.b16 %v597, %v593
    %v926 = vpack.c.b16 %v598, %v594
    %v927 = vpack.c.b16 %v603, %v599
    %v928 = vpack.c.b16 %v604, %v600
    %v929 = vpack.c.b16 %v605, %v601
    %v930 = vpack.c.b16 %v606, %v602
    %v931 = vpack.c.b16 %v611, %v607
    %v932 = vpack.c.b16 %v612, %v608
    %v933 = vpack.c.b16 %v613, %v609
    %v934 = vpack.c.b16 %v614, %v610
    %v935 = vpack.c.b16 %v619, %v615
    %v936 = vpack.c.b16 %v620, %v616
    %v937 = vpack.c.b16 %v621, %v617
    %v938 = vpack.c.b16 %v622, %v618
    %v939 = vpack.c.b16 %v627, %v623
    %v940 = vpack.c.b16 %v628, %v624
    %v941 = vpack.c.b16 %v629, %v625
    %v942 = vpack.c.b16 %v630, %v626
    %v943 = vpack.c.b16 %v635, %v631
    %v944 = vpack.c.b16 %v636, %v632
    %v945 = vpack.c.b16 %v637, %v633
    %v946 = vpack.c.b16 %v638, %v634
    %v947 = vpack.c.b16 %v643, %v639
    %v948 = vpack.c.b16 %v644, %v640
    %v949 = vpack.c.b16 %v645, %v641
    %v950 = vpack.c.b16 %v646, %v642
    %v951 = vpack.c.b16 %v651, %v647
    %v952 = vpack.c.b16 %v652, %v648
    %v953 = vpack.c.b16 %v653, %v649
    %v954 = vpack.c.b16 %v654, %v650
    %v955 = vpack.c.b16 %v659, %v655
    %v956 = vpack.c.b16 %v660, %v656
    %v957 = vpack.c.b16 %v661, %v657
    %v958 = vpack.c.b16 %v662, %v658
    %v959 = vpack.c.b16 %v667, %v663
    %v960 = vpack.c.b16 %v668, %v664
    %v961 = vpack.c.b16 %v669, %v665
    %v962 = vpack.c.b16 %v670, %v666
    %v963 = vpack.c.b16 %v675, %v671
    %v964 = vpack.c.b16 %v676, %v672
    %v965 = vpack.c.b16 %v677, %v673
    %v966 = vpack.c.b16 %v678, %v674
    %v967 = vpack.c.b16 %v683, %v679
    %v968 = vpack.c.b16 %v684, %v680
    %v969 = vpack.c.b16 %v685, %v681
    %v970 = vpack.c.b16 %v686, %v682
    %v971 = vpack.c.b16 %v691, %v687
    %v972 = vpack.c.b16 %v692, %v688
    %v973 = vpack.c.b16 %v693, %v689
    %v974 = vpack.c.b16 %v694, %v690
    %v975 = vpack.c.b16 %v699, %v695
    %v976 = vpack.c.b16 %v700, %v696
    %v977 = vpack.c.b16 %v701, %v697
    %v978 = vpack.c.b16 %v702, %v698
    %v979 = vpack.c.b16 %v707, %v703
    %v980 = vpack.c.b16 %v708, %v704
    %v981 = vpack.c.b16 %v709, %v705
    %v982 = vpack.c.b16 %v710, %v706
    %v983 = vpack.c.b16 %v715, %v711
    %v984 = vpack.c.b16 %v716, %v712
    %v985 = vpack.c.b16 %v717, %v713
    %v986 = vpack.c.b16 %v718, %v714
    %v987 = vpack.c.b16 %v723, %v719
    %v988 = vpack.c.b16 %v724, %v720
    %v989 = vpack.c.b16 %v725, %v721
    %v990 = vpack.c.b16 %v726, %v722
    %v991 = vpack.c.b16 %v731, %v727
    %v992 = vpack.c.b16 %v732, %v728
    %v993 = vpack.c.b16 %v733, %v729
    %v994 = vpack.c.b16 %v734, %v730
    %v995 = vpack.c.b16 %v739, %v735
    %v996 = vpack.c.b16 %v740, %v736
    %v997 = vpack.c.b16 %v741, %v737
    %v998 = vpack.c.b16 %v742, %v738
    %v999 = vpack.c.b16 %v747, %v743
    %v1000 = vpack.c.b16 %v748, %v744
    %v1001 = vpack.c.b16 %v749, %v745
    %v1002 = vpack.c.b16 %v750, %v746
    %v1003 = vpack.c.b16 %v755, %v751
    %v1004 = vpack.c.b16 %v756, %v752
    %v1005 = vpack.c.b16 %v757, %v753
    %v1006 = vpack.c.b16 %v758, %v754
    %v1007 = vpack.c.b16 %v763, %v759
    %v1008 = vpack.c.b16 %v764, %v760
    %v1009 = vpack.c.b16 %v765, %v761
    %v1010 = vpack.c.b16 %v766, %v762
    %v1011 = vpack.c.b16 %v771, %v767
    %v1012 = vpack.c.b16 %v772, %v768
    %v1013 = vpack.c.b16 %v773, %v769
    %v1014 = vpack.c.b16 %v774, %v770
    %v1015 = vpack.c.b16 %v779, %v775
    %v1016 = vpack.c.b16 %v780, %v776
    %v1017 = vpack.c.b16 %v781, %v777
    %v1018 = vpack.c.b16 %v782, %v778
    %v1019 = vpack.c.b16 %v787, %v783
    %v1020 = vpack.c.b16 %v788, %v784
    %v1021 = vpack.c.b16 %v789, %v785
    %v1022 = vpack.c.b16 %v790, %v786
    %v1023 = vpack.c.b16 %v795, %v791
    %v1024 = vpack.c.b16 %v796, %v792
    %v1025 = vpack.c.b16 %v797, %v793
    %v1026 = vpack.c.b16 %v798, %v794
    %v1027 = vpack.c.b16 %v803, %v799
    %v1028 = vpack.c.b16 %v804, %v800
    %v1029 = vpack.c.b16 %v805, %v801
    %v1030 = vpack.c.b16 %v806, %v802
    %v1031 = vpack.c.b16 %v811, %v807
    %v1032 = vpack.c.b16 %v812, %v808
    %v1033 = vpack.c.b16 %v813, %v809
    %v1034 = vpack.c.b16 %v814, %v810
    %v1035 = vpack.c.b16 %v819, %v815
    %v1036 = vpack.c.b16 %v820, %v816
    %v1037 = vpack.c.b16 %v821, %v817
    %v1038 = vpack.c.b16 %v822, %v818
    %v1039 = vpack.c.b16 %v827, %v823
    %v1040 = vpack.c.b16 %v828, %v824
    %v1041 = vpack.c.b16 %v829, %v825
    %v1042 = vpack.c.b16 %v830, %v826
    %v1043 = vpack.c.b16 %v835, %v831
    %v1044 = vpack.c.b16 %v836, %v832
    %v1045 = vpack.c.b16 %v837, %v833
    %v1046 = vpack.c.b16 %v838, %v834
    %v1047 = vpack.c.b16 %v843, %v839
    %v1048 = vpack.c.b16 %v844, %v840
    %v1049 = vpack.c.b16 %v845, %v841
    %v1050 = vpack.c.b16 %v846, %v842
    %v1051 = vpack.c.b16 %v851, %v847
    %v1052 = vpack.c.b16 %v852, %v848
    %v1053 = vpack.c.b16 %v853, %v849
    %v1054 = vpack.c.b16 %v854, %v850
    %v1055 = vpack.c.b16 %v859, %v855
    %v1056 = vpack.c.b16 %v860, %v856
    %v1057 = vpack.c.b16 %v861, %v857
    %v1058 = vpack.c.b16 %v862, %v858
    %v1059 = vpack.c.b16 %v867, %v863
    %v1060 = vpack.c.b16 %v868, %v864
    %v1061 = vpack.c.b16 %v869, %v865
    %v1062 = vpack.c.b16 %v870, %v866
    %1255 = vmatprep.subr.bf16.mxu0 %v872
    %1256 = vmatpush1.bf16.msra.mxu0 %v871
    %1257 = vmatprep.subr.bf16.mxu0 %v876
    %1258 = vmatpush1.bf16.msra.mxu0 %v875
    %1259 = vmatprep.subr.bf16.mxu0 %v880
    %1260 = vmatpush1.bf16.msra.mxu0 %v879
    %1261 = vmatprep.subr.bf16.mxu0 %v884
    %1262 = vmatpush1.bf16.msra.mxu0 %v883
    %1263 = vmatprep.subr.bf16.mxu0 %v888
    %1264 = vmatpush1.bf16.msra.mxu0 %v887
    %1265 = vmatprep.subr.bf16.mxu0 %v892
    %1266 = vmatpush1.bf16.msra.mxu0 %v891
    %1267 = vmatprep.subr.bf16.mxu0 %v896
    %1268 = vmatpush1.bf16.msra.mxu0 %v895
    %1269 = vmatprep.subr.bf16.mxu0 %v900
    %1270 = vmatpush1.bf16.msra.mxu0 %v899
    %1271 = vmatprep.subr.bf16.mxu0 %v904
    %1272 = vmatpush1.bf16.msra.mxu0 %v903
    %1273 = vmatprep.subr.bf16.mxu0 %v908
    %1274 = vmatpush1.bf16.msra.mxu0 %v907
    %1275 = vmatprep.subr.bf16.mxu0 %v912
    %1276 = vmatpush1.bf16.msra.mxu0 %v911
    %1277 = vmatprep.subr.bf16.mxu0 %v916
    %1278 = vmatpush1.bf16.msra.mxu0 %v915
    %1279 = vmatprep.subr.bf16.mxu0 %v920
    %1280 = vmatpush1.bf16.msra.mxu0 %v919
    %1281 = vmatprep.subr.bf16.mxu0 %v924
    %1282 = vmatpush1.bf16.msra.mxu0 %v923
    %1283 = vmatprep.subr.bf16.mxu0 %v928
    %1284 = vmatpush1.bf16.msra.mxu0 %v927
    %1285 = vmatprep.subr.bf16.mxu0 %v932
    %1286 = vmatpush1.bf16.msra.mxu0 %v931
    %1287 = vmatprep.mubr.bf16.mxu0 %v76
    %1288 = vmatmul.mubr.bf16.gmra.mrb[0].mxu0 %v75
    %v1289 = vpop.f32.mrb[0].mxu0
    %v1290 = vadd.f32 %v278, %v1289
    %v1291 = vpop.f32.mrb[0].mxu0
    %v1292 = vadd.f32 %v282, %v1291
    %v1293 = vpop.f32.mrb[0].mxu0
    %v1294 = vpop.f32.mrb[0].mxu0
    %1295 = vdwg.mxu0
    %1296 = vmatprep.subr.bf16.mxu0 %v936
    %1297 = vmatpush1.bf16.msra.mxu0 %v935
    %1298 = vmatprep.subr.bf16.mxu0 %v940
    %1299 = vmatpush1.bf16.msra.mxu0 %v939
    %1300 = vmatprep.subr.bf16.mxu0 %v944
    %1301 = vmatpush1.bf16.msra.mxu0 %v943
    %1302 = vmatprep.subr.bf16.mxu0 %v948
    %1303 = vmatpush1.bf16.msra.mxu0 %v947
    %1304 = vmatprep.subr.bf16.mxu0 %v952
    %1305 = vmatpush1.bf16.msra.mxu0 %v951
    %1306 = vmatprep.subr.bf16.mxu0 %v956
    %1307 = vmatpush1.bf16.msra.mxu0 %v955
    %1308 = vmatprep.subr.bf16.mxu0 %v960
    %1309 = vmatpush1.bf16.msra.mxu0 %v959
    %1310 = vmatprep.subr.bf16.mxu0 %v964
    %1311 = vmatpush1.bf16.msra.mxu0 %v963
    %1312 = vmatprep.subr.bf16.mxu0 %v968
    %1313 = vmatpush1.bf16.msra.mxu0 %v967
    %1314 = vmatprep.subr.bf16.mxu0 %v972
    %1315 = vmatpush1.bf16.msra.mxu0 %v971
    %1316 = vmatprep.subr.bf16.mxu0 %v976
    %1317 = vmatpush1.bf16.msra.mxu0 %v975
    %1318 = vmatprep.subr.bf16.mxu0 %v980
    %1319 = vmatpush1.bf16.msra.mxu0 %v979
    %1320 = vmatprep.subr.bf16.mxu0 %v984
    %1321 = vmatpush1.bf16.msra.mxu0 %v983
    %1322 = vmatprep.subr.bf16.mxu0 %v988
    %1323 = vmatpush1.bf16.msra.mxu0 %v987
    %1324 = vmatprep.subr.bf16.mxu0 %v992
    %1325 = vmatpush1.bf16.msra.mxu0 %v991
    %1326 = vmatprep.subr.bf16.mxu0 %v996
    %1327 = vmatpush1.bf16.msra.mxu0 %v995
    %1328 = vmatprep.mubr.bf16.mxu0 %v78
    %1329 = vmatmul.mubr.bf16.gmra.mrb[0].mxu0 %v77
    %v1330 = vpop.f32.mrb[0].mxu0
    %v1331 = vadd.f32 %v1290, %v1330
    %v1332 = vpop.f32.mrb[0].mxu0
    %v1333 = vadd.f32 %v1292, %v1332
    %v1334 = vpop.f32.mrb[0].mxu0
    %v1335 = vpop.f32.mrb[0].mxu0
    %1336 = vdwg.mxu0
    %1337 = vmatprep.subr.bf16.mxu0 %v1000
    %1338 = vmatpush1.bf16.msra.mxu0 %v999
    %1339 = vmatprep.subr.bf16.mxu0 %v1004
    %1340 = vmatpush1.bf16.msra.mxu0 %v1003
    %1341 = vmatprep.subr.bf16.mxu0 %v1008
    %1342 = vmatpush1.bf16.msra.mxu0 %v1007
    %1343 = vmatprep.subr.bf16.mxu0 %v1012
    %1344 = vmatpush1.bf16.msra.mxu0 %v1011
    %1345 = vmatprep.subr.bf16.mxu0 %v1016
    %1346 = vmatpush1.bf16.msra.mxu0 %v1015
    %1347 = vmatprep.subr.bf16.mxu0 %v1020
    %1348 = vmatpush1.bf16.msra.mxu0 %v1019
    %1349 = vmatprep.subr.bf16.mxu0 %v1024
    %1350 = vmatpush1.bf16.msra.mxu0 %v1023
    %1351 = vmatprep.subr.bf16.mxu0 %v1028
    %1352 = vmatpush1.bf16.msra.mxu0 %v1027
    %1353 = vmatprep.subr.bf16.mxu0 %v1032
    %1354 = vmatpush1.bf16.msra.mxu0 %v1031
    %1355 = vmatprep.subr.bf16.mxu0 %v1036
    %1356 = vmatpush1.bf16.msra.mxu0 %v1035
    %1357 = vmatprep.subr.bf16.mxu0 %v1040
    %1358 = vmatpush1.bf16.msra.mxu0 %v1039
    %1359 = vmatprep.subr.bf16.mxu0 %v1044
    %1360 = vmatpush1.bf16.msra.mxu0 %v1043
    %1361 = vmatprep.subr.bf16.mxu0 %v1048
    %1362 = vmatpush1.bf16.msra.mxu0 %v1047
    %1363 = vmatprep.subr.bf16.mxu0 %v1052
    %1364 = vmatpush1.bf16.msra.mxu0 %v1051
    %1365 = vmatprep.subr.bf16.mxu0 %v1056
    %1366 = vmatpush1.bf16.msra.mxu0 %v1055
    %1367 = vmatprep.subr.bf16.mxu0 %v1060
    %1368 = vmatpush1.bf16.msra.mxu0 %v1059
    %1369 = vmatprep.mubr.bf16.mxu0 %v80
    %1370 = vmatmul.mubr.bf16.gmra.mrb[0].mxu0 %v79
    %v1371 = vpop.f32.mrb[0].mxu0
    %v1372 = vadd.f32 %v1331, %v1371
    %v1373 = vpop.f32.mrb[0].mxu0
    %v1374 = vadd.f32 %v1333, %v1373
    %v1375 = vpop.f32.mrb[0].mxu0
    %v1376 = vpop.f32.mrb[0].mxu0
    %1377 = vdwg.mxu0
    %1378 = vmatprep.subr.bf16.mxu0 %v874
    %1379 = vmatpush1.bf16.msra.mxu0 %v873
    %1380 = vmatprep.subr.bf16.mxu0 %v878
    %1381 = vmatpush1.bf16.msra.mxu0 %v877
    %1382 = vmatprep.subr.bf16.mxu0 %v882
    %1383 = vmatpush1.bf16.msra.mxu0 %v881
    %1384 = vmatprep.subr.bf16.mxu0 %v886
    %1385 = vmatpush1.bf16.msra.mxu0 %v885
    %1386 = vmatprep.subr.bf16.mxu0 %v890
    %1387 = vmatpush1.bf16.msra.mxu0 %v889
    %1388 = vmatprep.subr.bf16.mxu0 %v894
    %1389 = vmatpush1.bf16.msra.mxu0 %v893
    %1390 = vmatprep.subr.bf16.mxu0 %v898
    %1391 = vmatpush1.bf16.msra.mxu0 %v897
    %1392 = vmatprep.subr.bf16.mxu0 %v902
    %1393 = vmatpush1.bf16.msra.mxu0 %v901
    %1394 = vmatprep.subr.bf16.mxu0 %v906
    %1395 = vmatpush1.bf16.msra.mxu0 %v905
    %1396 = vmatprep.subr.bf16.mxu0 %v910
    %1397 = vmatpush1.bf16.msra.mxu0 %v909
    %1398 = vmatprep.subr.bf16.mxu0 %v914
    %1399 = vmatpush1.bf16.msra.mxu0 %v913
    %1400 = vmatprep.subr.bf16.mxu0 %v918
    %1401 = vmatpush1.bf16.msra.mxu0 %v917
    %1402 = vmatprep.subr.bf16.mxu0 %v922
    %1403 = vmatpush1.bf16.msra.mxu0 %v921
    %1404 = vmatprep.subr.bf16.mxu0 %v926
    %1405 = vmatpush1.bf16.msra.mxu0 %v925
    %1406 = vmatprep.subr.bf16.mxu0 %v930
    %1407 = vmatpush1.bf16.msra.mxu0 %v929
    %1408 = vmatprep.subr.bf16.mxu0 %v934
    %1409 = vmatpush1.bf16.msra.mxu0 %v933
    %1410 = vmatprep.mubr.bf16.mxu0 %v76
    %1411 = vmatmul.mubr.bf16.gmra.mrb[0].mxu0 %v75
    %v1412 = vpop.f32.mrb[0].mxu0
    %v1413 = vadd.f32 %v286, %v1412
    %v1414 = vpop.f32.mrb[0].mxu0
    %v1415 = vadd.f32 %v290, %v1414
    %v1416 = vpop.f32.mrb[0].mxu0
    %v1417 = vpop.f32.mrb[0].mxu0
    %1418 = vdwg.mxu0
    %1419 = vmatprep.subr.bf16.mxu0 %v938
    %1420 = vmatpush1.bf16.msra.mxu0 %v937
    %1421 = vmatprep.subr.bf16.mxu0 %v942
    %1422 = vmatpush1.bf16.msra.mxu0 %v941
    %1423 = vmatprep.subr.bf16.mxu0 %v946
    %1424 = vmatpush1.bf16.msra.mxu0 %v945
    %1425 = vmatprep.subr.bf16.mxu0 %v950
    %1426 = vmatpush1.bf16.msra.mxu0 %v949
    %1427 = vmatprep.subr.bf16.mxu0 %v954
    %1428 = vmatpush1.bf16.msra.mxu0 %v953
    %1429 = vmatprep.subr.bf16.mxu0 %v958
    %1430 = vmatpush1.bf16.msra.mxu0 %v957
    %1431 = vmatprep.subr.bf16.mxu0 %v962
    %1432 = vmatpush1.bf16.msra.mxu0 %v961
    %1433 = vmatprep.subr.bf16.mxu0 %v966
    %1434 = vmatpush1.bf16.msra.mxu0 %v965
    %1435 = vmatprep.subr.bf16.mxu0 %v970
    %1436 = vmatpush1.bf16.msra.mxu0 %v969
    %1437 = vmatprep.subr.bf16.mxu0 %v974
    %1438 = vmatpush1.bf16.msra.mxu0 %v973
    %1439 = vmatprep.subr.bf16.mxu0 %v978
    %1440 = vmatpush1.bf16.msra.mxu0 %v977
    %1441 = vmatprep.subr.bf16.mxu0 %v982
    %1442 = vmatpush1.bf16.msra.mxu0 %v981
    %1443 = vmatprep.subr.bf16.mxu0 %v986
    %1444 = vmatpush1.bf16.msra.mxu0 %v985
    %1445 = vmatprep.subr.bf16.mxu0 %v990
    %1446 = vmatpush1.bf16.msra.mxu0 %v989
    %1447 = vmatprep.subr.bf16.mxu0 %v994
    %1448 = vmatpush1.bf16.msra.mxu0 %v993
    %1449 = vmatprep.subr.bf16.mxu0 %v998
    %1450 = vmatpush1.bf16.msra.mxu0 %v997
    %1451 = vmatprep.mubr.bf16.mxu0 %v78
    %1452 = vmatmul.mubr.bf16.gmra.mrb[0].mxu0 %v77
    %v1453 = vpop.f32.mrb[0].mxu0
    %v1454 = vadd.f32 %v1413, %v1453
    %v1455 = vpop.f32.mrb[0].mxu0
    %v1456 = vadd.f32 %v1415, %v1455
    %v1457 = vpop.f32.mrb[0].mxu0
    %v1458 = vpop.f32.mrb[0].mxu0
    %1459 = vdwg.mxu0
    %1460 = vmatprep.subr.bf16.mxu0 %v1002
    %1461 = vmatpush1.bf16.msra.mxu0 %v1001
    %1462 = vmatprep.subr.bf16.mxu0 %v1006
    %1463 = vmatpush1.bf16.msra.mxu0 %v1005
    %1464 = vmatprep.subr.bf16.mxu0 %v1010
    %1465 = vmatpush1.bf16.msra.mxu0 %v1009
    %1466 = vmatprep.subr.bf16.mxu0 %v1014
    %1467 = vmatpush1.bf16.msra.mxu0 %v1013
    %1468 = vmatprep.subr.bf16.mxu0 %v1018
    %1469 = vmatpush1.bf16.msra.mxu0 %v1017
    %1470 = vmatprep.subr.bf16.mxu0 %v1022
    %1471 = vmatpush1.bf16.msra.mxu0 %v1021
    %1472 = vmatprep.subr.bf16.mxu0 %v1026
    %1473 = vmatpush1.bf16.msra.mxu0 %v1025
    %1474 = vmatprep.subr.bf16.mxu0 %v1030
    %1475 = vmatpush1.bf16.msra.mxu0 %v1029
    %1476 = vmatprep.subr.bf16.mxu0 %v1034
    %1477 = vmatpush1.bf16.msra.mxu0 %v1033
    %1478 = vmatprep.subr.bf16.mxu0 %v1038
    %1479 = vmatpush1.bf16.msra.mxu0 %v1037
    %1480 = vmatprep.subr.bf16.mxu0 %v1042
    %1481 = vmatpush1.bf16.msra.mxu0 %v1041
    %1482 = vmatprep.subr.bf16.mxu0 %v1046
    %1483 = vmatpush1.bf16.msra.mxu0 %v1045
    %1484 = vmatprep.subr.bf16.mxu0 %v1050
    %1485 = vmatpush1.bf16.msra.mxu0 %v1049
    %1486 = vmatprep.subr.bf16.mxu0 %v1054
    %1487 = vmatpush1.bf16.msra.mxu0 %v1053
    %1488 = vmatprep.subr.bf16.mxu0 %v1058
    %1489 = vmatpush1.bf16.msra.mxu0 %v1057
    %1490 = vmatprep.subr.bf16.mxu0 %v1062
    %1491 = vmatpush1.bf16.msra.mxu0 %v1061
    %1492 = vmatprep.mubr.bf16.mxu0 %v80
    %1493 = vmatmul.mubr.bf16.gmra.mrb[0].mxu0 %v79
    %v1494 = vpop.f32.mrb[0].mxu0
    %v1495 = vadd.f32 %v1454, %v1494
    %v1496 = vpop.f32.mrb[0].mxu0
    %v1497 = vadd.f32 %v1456, %v1496
    %v1498 = vpop.f32.mrb[0].mxu0
    %v1499 = vpop.f32.mrb[0].mxu0
    %1500 = vdwg.mxu0
    %vm1501 = vcmp.gt.f32.partialorder %v1372, 0.0
    %vm1502 = vcmp.gt.f32.partialorder %v1374, 0.0
    %vm1503 = vcmp.gt.f32.partialorder %v1495, 0.0
    %vm1504 = vcmp.gt.f32.partialorder %v1497, 0.0
    %v1505 = vmul.f32 %v1372, 0.2
    %v1506 = vmul.f32 %v1374, 0.2
    %v1507 = vmul.f32 %v1495, 0.2
    %v1508 = vmul.f32 %v1497, 0.2
    %v1509 = vsel %vm1501, %v1372, %v1505
    %v1510 = vsel %vm1502, %v1374, %v1506
    %v1511 = vsel %vm1503, %v1495, %v1507
    %v1512 = vsel %vm1504, %v1497, %v1508
    %v1513 = vpack.c.bf16 %v1509, %v1509
    %v1514 = vpack.c.bf16 %v1510, %v1510
    %v1515 = vpack.c.bf16 %v1511, %v1511
    %v1516 = vpack.c.bf16 %v1512, %v1512
    %v1517 = vld [vmem:[#allocation8] sm:$0xff]
    %v1518 = vld [vmem:[#allocation8 + $0x8] sm:$0xff]
    %v1519 = vld [vmem:[#allocation8 + $0x10] sm:$0xff]
    %v1520 = vld [vmem:[#allocation8 + $0x18] sm:$0xff]
    %v1521 = vld [vmem:[#allocation8 + $0x20] sm:$0xff]
    %v1522 = vld [vmem:[#allocation8 + $0x28] sm:$0xff]
    %v1523 = vld [vmem:[#allocation8 + $0x30] sm:$0xff]
    %v1524 = vld [vmem:[#allocation8 + $0x38] sm:$0xff]
    %v1525 = vld [vmem:[#allocation8 + $0x40] sm:$0xff]
    %v1526 = vld [vmem:[#allocation8 + $0x48] sm:$0xff]
    %v1527 = vld [vmem:[#allocation8 + $0x50] sm:$0xff]
    %v1528 = vld [vmem:[#allocation8 + $0x58] sm:$0xff]
    %v1529 = vld [vmem:[#allocation8 + $0x60] sm:$0xff]
    %v1530 = vld [vmem:[#allocation8 + $0x68] sm:$0xff]
    %v1531 = vld [vmem:[#allocation8 + $0x70] sm:$0xff]
    %v1532 = vld [vmem:[#allocation8 + $0x78] sm:$0xff]
    %v1533 = vld [vmem:[#allocation8 + $0x80] sm:$0xff]
    %v1534 = vld [vmem:[#allocation8 + $0x88] sm:$0xff]
    %v1535 = vld [vmem:[#allocation8 + $0x90] sm:$0xff]
    %v1536 = vld [vmem:[#allocation8 + $0x98] sm:$0xff]
    %v1537 = vld [vmem:[#allocation8 + $0xa0] sm:$0xff]
    %v1538 = vld [vmem:[#allocation8 + $0xa8] sm:$0xff]
    %v1539 = vld [vmem:[#allocation8 + $0xb0] sm:$0xff]
    %v1540 = vld [vmem:[#allocation8 + $0xb8] sm:$0xff]
    %v1541 = vld [vmem:[#allocation8 + $0xc0] sm:$0xff]
    %v1542 = vld [vmem:[#allocation8 + $0xc8] sm:$0xff]
    %v1543 = vld [vmem:[#allocation8 + $0xd0] sm:$0xff]
    %v1544 = vld [vmem:[#allocation8 + $0xd8] sm:$0xff]
    %v1545 = vld [vmem:[#allocation8 + $0xe0] sm:$0xff]
    %v1546 = vld [vmem:[#allocation8 + $0xe8] sm:$0xff]
    %v1547 = vld [vmem:[#allocation8 + $0xf0] sm:$0xff]
    %v1548 = vld [vmem:[#allocation8 + $0xf8] sm:$0xff]
    %v1549 = vld [vmem:[#allocation8 + $0x100] sm:$0xff]
    %v1550 = vld [vmem:[#allocation8 + $0x108] sm:$0xff]
    %v1551 = vld [vmem:[#allocation8 + $0x110] sm:$0xff]
    %v1552 = vld [vmem:[#allocation8 + $0x118] sm:$0xff]
    %v1553 = vld [vmem:[#allocation8 + $0x120] sm:$0xff]
    %v1554 = vld [vmem:[#allocation8 + $0x128] sm:$0xff]
    %v1555 = vld [vmem:[#allocation8 + $0x130] sm:$0xff]
    %v1556 = vld [vmem:[#allocation8 + $0x138] sm:$0xff]
    %v1557 = vld [vmem:[#allocation8 + $0x140] sm:$0xff]
    %v1558 = vld [vmem:[#allocation8 + $0x148] sm:$0xff]
    %v1559 = vld [vmem:[#allocation8 + $0x150] sm:$0xff]
    %v1560 = vld [vmem:[#allocation8 + $0x158] sm:$0xff]
    %v1561 = vld [vmem:[#allocation8 + $0x160] sm:$0xff]
    %v1562 = vld [vmem:[#allocation8 + $0x168] sm:$0xff]
    %v1563 = vld [vmem:[#allocation8 + $0x170] sm:$0xff]
    %v1564 = vld [vmem:[#allocation8 + $0x178] sm:$0xff]
    %v1565 = vld [vmem:[#allocation8 + $0x180] sm:$0xff]
    %v1566 = vld [vmem:[#allocation8 + $0x188] sm:$0xff]
    %v1567 = vld [vmem:[#allocation8 + $0x190] sm:$0xff]
    %v1568 = vld [vmem:[#allocation8 + $0x198] sm:$0xff]
    %v1569 = vld [vmem:[#allocation8 + $0x1a0] sm:$0xff]
    %v1570 = vld [vmem:[#allocation8 + $0x1a8] sm:$0xff]
    %v1571 = vld [vmem:[#allocation8 + $0x1b0] sm:$0xff]
    %v1572 = vld [vmem:[#allocation8 + $0x1b8] sm:$0xff]
    %v1573 = vld [vmem:[#allocation8 + $0x1c0] sm:$0xff]
    %v1574 = vld [vmem:[#allocation8 + $0x1c8] sm:$0xff]
    %v1575 = vld [vmem:[#allocation8 + $0x1d0] sm:$0xff]
    %v1576 = vld [vmem:[#allocation8 + $0x1d8] sm:$0xff]
    %v1577 = vld [vmem:[#allocation8 + $0x1e0] sm:$0xff]
    %v1578 = vld [vmem:[#allocation8 + $0x1e8] sm:$0xff]
    %v1579 = vld [vmem:[#allocation8 + $0x1f0] sm:$0xff]
    %v1580 = vld [vmem:[#allocation8 + $0x1f8] sm:$0xff]
    %v1581 = vld [vmem:[%s4] sm:$0x3]
    %v1583 = vlaneseq
    %v1584 = vshrl.u32 %v1583, 7
    %v1585 = vsub.s32 0, %v1584
    %v1586 = vrot.slane %v1581, %v1585
    %v1587 = vlaneseq
    %v1588 = vshrl.u32 %v1587, 7
    %v1589 = vsub.s32 1, %v1588
    %v1590 = vrot.slane %v1581, %v1589
    %v1657 = vunpack.c.l.b16 %v1517
    %v1658 = vunpack.c.h.b16 %v1517
    %v1659 = vunpack.c.l.b16 %v1518
    %v1660 = vunpack.c.h.b16 %v1518
    %v1661 = vunpack.c.l.b16 %v1519
    %v1662 = vunpack.c.h.b16 %v1519
    %v1663 = vunpack.c.l.b16 %v1520
    %v1664 = vunpack.c.h.b16 %v1520
    %v1665 = vunpack.c.l.b16 %v1521
    %v1666 = vunpack.c.h.b16 %v1521
    %v1667 = vunpack.c.l.b16 %v1522
    %v1668 = vunpack.c.h.b16 %v1522
    %v1669 = vunpack.c.l.b16 %v1523
    %v1670 = vunpack.c.h.b16 %v1523
    %v1671 = vunpack.c.l.b16 %v1524
    %v1672 = vunpack.c.h.b16 %v1524
    %v1673 = vunpack.c.l.b16 %v1525
    %v1674 = vunpack.c.h.b16 %v1525
    %v1675 = vunpack.c.l.b16 %v1526
    %v1676 = vunpack.c.h.b16 %v1526
    %v1677 = vunpack.c.l.b16 %v1527
    %v1678 = vunpack.c.h.b16 %v1527
    %v1679 = vunpack.c.l.b16 %v1528
    %v1680 = vunpack.c.h.b16 %v1528
    %v1681 = vunpack.c.l.b16 %v1529
    %v1682 = vunpack.c.h.b16 %v1529
    %v1683 = vunpack.c.l.b16 %v1530
    %v1684 = vunpack.c.h.b16 %v1530
    %v1685 = vunpack.c.l.b16 %v1531
    %v1686 = vunpack.c.h.b16 %v1531
    %v1687 = vunpack.c.l.b16 %v1532
    %v1688 = vunpack.c.h.b16 %v1532
    %v1689 = vunpack.c.l.b16 %v1533
    %v1690 = vunpack.c.h.b16 %v1533
    %v1691 = vunpack.c.l.b16 %v1534
    %v1692 = vunpack.c.h.b16 %v1534
    %v1693 = vunpack.c.l.b16 %v1535
    %v1694 = vunpack.c.h.b16 %v1535
    %v1695 = vunpack.c.l.b16 %v1536
    %v1696 = vunpack.c.h.b16 %v1536
    %v1697 = vunpack.c.l.b16 %v1537
    %v1698 = vunpack.c.h.b16 %v1537
    %v1699 = vunpack.c.l.b16 %v1538
    %v1700 = vunpack.c.h.b16 %v1538
    %v1701 = vunpack.c.l.b16 %v1539
    %v1702 = vunpack.c.h.b16 %v1539
    %v1703 = vunpack.c.l.b16 %v1540
    %v1704 = vunpack.c.h.b16 %v1540
    %v1705 = vunpack.c.l.b16 %v1541
    %v1706 = vunpack.c.h.b16 %v1541
    %v1707 = vunpack.c.l.b16 %v1542
    %v1708 = vunpack.c.h.b16 %v1542
    %v1709 = vunpack.c.l.b16 %v1543
    %v1710 = vunpack.c.h.b16 %v1543
    %v1711 = vunpack.c.l.b16 %v1544
    %v1712 = vunpack.c.h.b16 %v1544
    %v1713 = vunpack.c.l.b16 %v1545
    %v1714 = vunpack.c.h.b16 %v1545
    %v1715 = vunpack.c.l.b16 %v1546
    %v1716 = vunpack.c.h.b16 %v1546
    %v1717 = vunpack.c.l.b16 %v1547
    %v1718 = vunpack.c.h.b16 %v1547
    %v1719 = vunpack.c.l.b16 %v1548
    %v1720 = vunpack.c.h.b16 %v1548
    %v1721 = vunpack.c.l.b16 %v1549
    %v1722 = vunpack.c.h.b16 %v1549
    %v1723 = vunpack.c.l.b16 %v1550
    %v1724 = vunpack.c.h.b16 %v1550
    %v1725 = vunpack.c.l.b16 %v1551
    %v1726 = vunpack.c.h.b16 %v1551
    %v1727 = vunpack.c.l.b16 %v1552
    %v1728 = vunpack.c.h.b16 %v1552
    %v1729 = vunpack.c.l.b16 %v1553
    %v1730 = vunpack.c.h.b16 %v1553
    %v1731 = vunpack.c.l.b16 %v1554
    %v1732 = vunpack.c.h.b16 %v1554
    %v1733 = vunpack.c.l.b16 %v1555
    %v1734 = vunpack.c.h.b16 %v1555
    %v1735 = vunpack.c.l.b16 %v1556
    %v1736 = vunpack.c.h.b16 %v1556
    %v1737 = vunpack.c.l.b16 %v1557
    %v1738 = vunpack.c.h.b16 %v1557
    %v1739 = vunpack.c.l.b16 %v1558
    %v1740 = vunpack.c.h.b16 %v1558
    %v1741 = vunpack.c.l.b16 %v1559
    %v1742 = vunpack.c.h.b16 %v1559
    %v1743 = vunpack.c.l.b16 %v1560
    %v1744 = vunpack.c.h.b16 %v1560
    %v1745 = vunpack.c.l.b16 %v1561
    %v1746 = vunpack.c.h.b16 %v1561
    %v1747 = vunpack.c.l.b16 %v1562
    %v1748 = vunpack.c.h.b16 %v1562
    %v1749 = vunpack.c.l.b16 %v1563
    %v1750 = vunpack.c.h.b16 %v1563
    %v1751 = vunpack.c.l.b16 %v1564
    %v1752 = vunpack.c.h.b16 %v1564
    %v1753 = vunpack.c.l.b16 %v1565
    %v1754 = vunpack.c.h.b16 %v1565
    %v1755 = vunpack.c.l.b16 %v1566
    %v1756 = vunpack.c.h.b16 %v1566
    %v1757 = vunpack.c.l.b16 %v1567
    %v1758 = vunpack.c.h.b16 %v1567
    %v1759 = vunpack.c.l.b16 %v1568
    %v1760 = vunpack.c.h.b16 %v1568
    %v1761 = vunpack.c.l.b16 %v1569
    %v1762 = vunpack.c.h.b16 %v1569
    %v1763 = vunpack.c.l.b16 %v1570
    %v1764 = vunpack.c.h.b16 %v1570
    %v1765 = vunpack.c.l.b16 %v1571
    %v1766 = vunpack.c.h.b16 %v1571
    %v1767 = vunpack.c.l.b16 %v1572
    %v1768 = vunpack.c.h.b16 %v1572
    %v1769 = vunpack.c.l.b16 %v1573
    %v1770 = vunpack.c.h.b16 %v1573
    %v1771 = vunpack.c.l.b16 %v1574
    %v1772 = vunpack.c.h.b16 %v1574
    %v1773 = vunpack.c.l.b16 %v1575
    %v1774 = vunpack.c.h.b16 %v1575
    %v1775 = vunpack.c.l.b16 %v1576
    %v1776 = vunpack.c.h.b16 %v1576
    %v1777 = vunpack.c.l.b16 %v1577
    %v1778 = vunpack.c.h.b16 %v1577
    %v1779 = vunpack.c.l.b16 %v1578
    %v1780 = vunpack.c.h.b16 %v1578
    %v1781 = vunpack.c.l.b16 %v1579
    %v1782 = vunpack.c.h.b16 %v1579
    %v1783 = vunpack.c.l.b16 %v1580
    %v1784 = vunpack.c.h.b16 %v1580
    %v1785 = vpack.c.b16 %v1659, %v1657
    %v1786 = vpack.c.b16 %v1660, %v1658
    %v1787 = vpack.c.b16 %v1663, %v1661
    %v1788 = vpack.c.b16 %v1664, %v1662
    %v1789 = vpack.c.b16 %v1667, %v1665
    %v1790 = vpack.c.b16 %v1668, %v1666
    %v1791 = vpack.c.b16 %v1671, %v1669
    %v1792 = vpack.c.b16 %v1672, %v1670
    %v1793 = vpack.c.b16 %v1675, %v1673
    %v1794 = vpack.c.b16 %v1676, %v1674
    %v1795 = vpack.c.b16 %v1679, %v1677
    %v1796 = vpack.c.b16 %v1680, %v1678
    %v1797 = vpack.c.b16 %v1683, %v1681
    %v1798 = vpack.c.b16 %v1684, %v1682
    %v1799 = vpack.c.b16 %v1687, %v1685
    %v1800 = vpack.c.b16 %v1688, %v1686
    %v1801 = vpack.c.b16 %v1691, %v1689
    %v1802 = vpack.c.b16 %v1692, %v1690
    %v1803 = vpack.c.b16 %v1695, %v1693
    %v1804 = vpack.c.b16 %v1696, %v1694
    %v1805 = vpack.c.b16 %v1699, %v1697
    %v1806 = vpack.c.b16 %v1700, %v1698
    %v1807 = vpack.c.b16 %v1703, %v1701
    %v1808 = vpack.c.b16 %v1704, %v1702
    %v1809 = vpack.c.b16 %v1707, %v1705
    %v1810 = vpack.c.b16 %v1708, %v1706
    %v1811 = vpack.c.b16 %v1711, %v1709
    %v1812 = vpack.c.b16 %v1712, %v1710
    %v1813 = vpack.c.b16 %v1715, %v1713
    %v1814 = vpack.c.b16 %v1716, %v1714
    %v1815 = vpack.c.b16 %v1719, %v1717
    %v1816 = vpack.c.b16 %v1720, %v1718
    %v1817 = vpack.c.b16 %v1723, %v1721
    %v1818 = vpack.c.b16 %v1724, %v1722
    %v1819 = vpack.c.b16 %v1727, %v1725
    %v1820 = vpack.c.b16 %v1728, %v1726
    %v1821 = vpack.c.b16 %v1731, %v1729
    %v1822 = vpack.c.b16 %v1732, %v1730
    %v1823 = vpack.c.b16 %v1735, %v1733
    %v1824 = vpack.c.b16 %v1736, %v1734
    %v1825 = vpack.c.b16 %v1739, %v1737
    %v1826 = vpack.c.b16 %v1740, %v1738
    %v1827 = vpack.c.b16 %v1743, %v1741
    %v1828 = vpack.c.b16 %v1744, %v1742
    %v1829 = vpack.c.b16 %v1747, %v1745
    %v1830 = vpack.c.b16 %v1748, %v1746
    %v1831 = vpack.c.b16 %v1751, %v1749
    %v1832 = vpack.c.b16 %v1752, %v1750
    %v1833 = vpack.c.b16 %v1755, %v1753
    %v1834 = vpack.c.b16 %v1756, %v1754
    %v1835 = vpack.c.b16 %v1759, %v1757
    %v1836 = vpack.c.b16 %v1760, %v1758
    %v1837 = vpack.c.b16 %v1763, %v1761
    %v1838 = vpack.c.b16 %v1764, %v1762
    %v1839 = vpack.c.b16 %v1767, %v1765
    %v1840 = vpack.c.b16 %v1768, %v1766
    %v1841 = vpack.c.b16 %v1771, %v1769
    %v1842 = vpack.c.b16 %v1772, %v1770
    %v1843 = vpack.c.b16 %v1775, %v1773
    %v1844 = vpack.c.b16 %v1776, %v1774
    %v1845 = vpack.c.b16 %v1779, %v1777
    %v1846 = vpack.c.b16 %v1780, %v1778
    %v1847 = vpack.c.b16 %v1783, %v1781
    %v1848 = vpack.c.b16 %v1784, %v1782
    %1913 = vmatprep.subr.bf16.mxu0 %v1786
    %1914 = vmatpush1.bf16.msra.mxu0 %v1785
    %1915 = vmatprep.subr.bf16.mxu0 %v1788
    %1916 = vmatpush1.bf16.msra.mxu0 %v1787
    %1917 = vmatprep.subr.bf16.mxu0 %v1790
    %1918 = vmatpush1.bf16.msra.mxu0 %v1789
    %1919 = vmatprep.subr.bf16.mxu0 %v1792
    %1920 = vmatpush1.bf16.msra.mxu0 %v1791
    %1921 = vmatprep.subr.bf16.mxu0 %v1794
    %1922 = vmatpush1.bf16.msra.mxu0 %v1793
    %1923 = vmatprep.subr.bf16.mxu0 %v1796
    %1924 = vmatpush1.bf16.msra.mxu0 %v1795
    %1925 = vmatprep.subr.bf16.mxu0 %v1798
    %1926 = vmatpush1.bf16.msra.mxu0 %v1797
    %1927 = vmatprep.subr.bf16.mxu0 %v1800
    %1928 = vmatpush1.bf16.msra.mxu0 %v1799
    %1929 = vmatprep.subr.bf16.mxu0 %v1802
    %1930 = vmatpush1.bf16.msra.mxu0 %v1801
    %1931 = vmatprep.subr.bf16.mxu0 %v1804
    %1932 = vmatpush1.bf16.msra.mxu0 %v1803
    %1933 = vmatprep.subr.bf16.mxu0 %v1806
    %1934 = vmatpush1.bf16.msra.mxu0 %v1805
    %1935 = vmatprep.subr.bf16.mxu0 %v1808
    %1936 = vmatpush1.bf16.msra.mxu0 %v1807
    %1937 = vmatprep.subr.bf16.mxu0 %v1810
    %1938 = vmatpush1.bf16.msra.mxu0 %v1809
    %1939 = vmatprep.subr.bf16.mxu0 %v1812
    %1940 = vmatpush1.bf16.msra.mxu0 %v1811
    %1941 = vmatprep.subr.bf16.mxu0 %v1814
    %1942 = vmatpush1.bf16.msra.mxu0 %v1813
    %1943 = vmatprep.subr.bf16.mxu0 %v1816
    %1944 = vmatpush1.bf16.msra.mxu0 %v1815
    %1945 = vmatprep.mubr.bf16.mxu0 %v1514
    %1946 = vmatmul.mubr.bf16.gmra.mrb[0].mxu0 %v1513
    %v1947 = vpop.f32.mrb[0].mxu0
    %v1948 = vadd.f32 %v1586, %v1947
    %v1949 = vpop.f32.mrb[0].mxu0
    %v1950 = vadd.f32 %v1590, %v1949
    %v1951 = vpop.f32.mrb[0].mxu0
    %v1952 = vpop.f32.mrb[0].mxu0
    %1953 = vdwg.mxu0
    %1954 = vmatprep.subr.bf16.mxu0 %v1818
    %1955 = vmatpush1.bf16.msra.mxu0 %v1817
    %1956 = vmatprep.subr.bf16.mxu0 %v1820
    %1957 = vmatpush1.bf16.msra.mxu0 %v1819
    %1958 = vmatprep.subr.bf16.mxu0 %v1822
    %1959 = vmatpush1.bf16.msra.mxu0 %v1821
    %1960 = vmatprep.subr.bf16.mxu0 %v1824
    %1961 = vmatpush1.bf16.msra.mxu0 %v1823
    %1962 = vmatprep.subr.bf16.mxu0 %v1826
    %1963 = vmatpush1.bf16.msra.mxu0 %v1825
    %1964 = vmatprep.subr.bf16.mxu0 %v1828
    %1965 = vmatpush1.bf16.msra.mxu0 %v1827
    %1966 = vmatprep.subr.bf16.mxu0 %v1830
    %1967 = vmatpush1.bf16.msra.mxu0 %v1829
    %1968 = vmatprep.subr.bf16.mxu0 %v1832
    %1969 = vmatpush1.bf16.msra.mxu0 %v1831
    %1970 = vmatprep.subr.bf16.mxu0 %v1834
    %1971 = vmatpush1.bf16.msra.mxu0 %v1833
    %1972 = vmatprep.subr.bf16.mxu0 %v1836
    %1973 = vmatpush1.bf16.msra.mxu0 %v1835
    %1974 = vmatprep.subr.bf16.mxu0 %v1838
    %1975 = vmatpush1.bf16.msra.mxu0 %v1837
    %1976 = vmatprep.subr.bf16.mxu0 %v1840
    %1977 = vmatpush1.bf16.msra.mxu0 %v1839
    %1978 = vmatprep.subr.bf16.mxu0 %v1842
    %1979 = vmatpush1.bf16.msra.mxu0 %v1841
    %1980 = vmatprep.subr.bf16.mxu0 %v1844
    %1981 = vmatpush1.bf16.msra.mxu0 %v1843
    %1982 = vmatprep.subr.bf16.mxu0 %v1846
    %1983 = vmatpush1.bf16.msra.mxu0 %v1845
    %1984 = vmatprep.subr.bf16.mxu0 %v1848
    %1985 = vmatpush1.bf16.msra.mxu0 %v1847
    %1986 = vmatprep.mubr.bf16.mxu0 %v1516
    %1987 = vmatmul.mubr.bf16.gmra.mrb[0].mxu0 %v1515
    %v1988 = vpop.f32.mrb[0].mxu0
    %v1989 = vadd.f32 %v1948, %v1988
    %v1990 = vpop.f32.mrb[0].mxu0
    %v1991 = vadd.f32 %v1950, %v1990
    %v1992 = vpop.f32.mrb[0].mxu0
    %v1993 = vpop.f32.mrb[0].mxu0
    %1994 = vdwg.mxu0
    %vm1995 = vcmp.gt.f32.partialorder %v1989, 0.0
    %vm1996 = vcmp.gt.f32.partialorder %v1991, 0.0
    %v1997 = vmul.f32 %v1989, 0.2
    %v1998 = vmul.f32 %v1991, 0.2
    %v1999 = vsel %vm1995, %v1989, %v1997
    %v2000 = vsel %vm1996, %v1991, %v1998
    %v2001 = vld [vmem:[%s5] sm:$0xff]
    %v2002 = vpack.c.bf16 %v1999, %v1999
    %v2003 = vpack.c.bf16 %v2000, %v2000
    %v2005 = vunpack.c.l.b16 %v2001
    %v2006 = vunpack.c.h.b16 %v2001
    %v2007 = vpack.c.b16 %v2005, %v2005
    %v2008 = vpack.c.b16 %v2006, %v2006
    %2011 = vmatprep.subr.bf16.mxu0 %v2003
    %2012 = vmatpush1.bf16.xpose.msra.mxu0 %v2002
    %2013 = vmatprep.subr.bf16.mxu0 0
    %2014 = vmatpush1.bf16.xpose.msra.mxu0 0
    %2015 = vmatprep.subr.bf16.mxu0 0
    %2016 = vmatpush1.bf16.xpose.msra.mxu0 0
    %2017 = vmatprep.subr.bf16.mxu0 0
    %2018 = vmatpush1.bf16.xpose.msra.mxu0 0
    %2019 = vmatprep.subr.bf16.mxu0 0
    %2020 = vmatpush1.bf16.xpose.msra.mxu0 0
    %2021 = vmatprep.subr.bf16.mxu0 0
    %2022 = vmatpush1.bf16.xpose.msra.mxu0 0
    %2023 = vmatprep.subr.bf16.mxu0 0
    %2024 = vmatpush1.bf16.xpose.msra.mxu0 0
    %2025 = vmatprep.subr.bf16.mxu0 0
    %2026 = vmatpush1.bf16.xpose.msra.mxu0 0
    %2027 = vmatprep.subr.bf16.mxu0 0
    %2028 = vmatpush1.bf16.xpose.msra.mxu0 0
    %2029 = vmatprep.subr.bf16.mxu0 0
    %2030 = vmatpush1.bf16.xpose.msra.mxu0 0
    %2031 = vmatprep.subr.bf16.mxu0 0
    %2032 = vmatpush1.bf16.xpose.msra.mxu0 0
    %2033 = vmatprep.subr.bf16.mxu0 0
    %2034 = vmatpush1.bf16.xpose.msra.mxu0 0
    %2035 = vmatprep.subr.bf16.mxu0 0
    %2036 = vmatpush1.bf16.xpose.msra.mxu0 0
    %2037 = vmatprep.subr.bf16.mxu0 0
    %2038 = vmatpush1.bf16.xpose.msra.mxu0 0
    %2039 = vmatprep.subr.bf16.mxu0 0
    %2040 = vmatpush1.bf16.xpose.msra.mxu0 0
    %2041 = vmatprep.subr.bf16.mxu0 0
    %2042 = vmatpush1.bf16.xpose.msra.mxu0 0
    %2043 = vmatprep.mubr.bf16.mxu0 %v2008
    %2044 = vmatmul.mubr.bf16.gmra.mrb[0].mxu0 %v2007
    %v2045 = vpop.f32.mrb[0].mxu0
    %v2046 = vadd.f32 0.0, %v2045
    %v2047 = vpop.f32.mrb[0].mxu0
    %v2048 = vpop.f32.mrb[0].mxu0
    %v2049 = vpop.f32.mrb[0].mxu0
    %2050 = vdwg.mxu0
    %v2051 = vld [vmem:[#allocation2] sm:$0x1]
    %2053 = vset.pattern.permute.xlu0 0
    %2054 = vperm.xlu0 %2053, %v2051
    %v2055 = vpop.permute.xlu0 %2054
    %v2057 = vlaneseq
    %v2058 = vshrl.u32 %v2057, 7
    %v2059 = vsub.s32 0, %v2058
    %v2060 = vrot.slane %v2055, %v2059
    %v2061 = vadd.f32 %v2046, %v2060
    %v2062 = vxor.u32 %v2061, 2147483648
    %v2063 = vmul.f32 %v2062, 1.442695
    %v2064 = vpow.pop %v2063
    %v2065 = vadd.f32 %v2064, 1.0
    %v2066 = vrcp.pop %v2065
    %v2067 = vmul.f32 1.0, %v2066
    %vm2068 = vcmask 57344
    %2069 = vst.msk [vmem:[#allocation9] sm:$0x1] %vm2068, %v2067
    // Predicated region
    $region42: #{tpu_custom_call.1} parent=1 // pred_check
      _
    $region43: #{tpu_custom_call.1} parent=1 // pred_check_branch
      %2071 = sbr.rel (0) target = $region45
    $region44: #{tpu_custom_call.1} parent=1 // pred_region
      %s2073 = ssub.s32 16, 16
      %2074 = vsyncadd [#allocation5], %s2073
      %s2076 = sshll.u32 [#allocation9], 4
      %s2077 = int_to_ptr.vmem [resolvable:$true] %s2076
      %2079 = dma.vmem_to_hbm [thread:$0]  %s2077, 16, %s7, [#allocation5]
    $region45: #{tpu_custom_call.1} parent=1 // pred_fallthru
      _
    // Predicated region
    $region46: #{tpu_custom_call.1} parent=1 // pred_check
      _
    $region47: #{tpu_custom_call.1} parent=1 // pred_check_branch
      %2081 = sbr.rel (0) target = $region49
    $region48: #{tpu_custom_call.1} parent=1 // pred_region
      %2082 = dma.done [#allocation5], 16
    $region49: #{tpu_custom_call.1} parent=1 // pred_fallthru
      _
    %2083 = vsyncpa [#allocation4], 1
    %2084 = vsyncpa [#allocation7], 1
    %2085 = vsyncpa [#allocation5], 1

</llo_original>
